<compile_context>
chip_gen: v7x
topology: tpu7x:2x2x1
jax: 0.10.0
libtpu: 0.0.40
codegen_flags: <defaults>
</compile_context>

<pallas_src>
import jax
import jax.numpy as jnp
import numpy as np
from jax.experimental import pallas as pl
from jax.experimental.pallas import tpu as pltpu

BN_EPS = 1e-5


# ----------------------------------------------------------------------------
# Kernel
# ----------------------------------------------------------------------------
def _mlp_kernel(x_ref,
                w1_ref, b1_ref,
                w2_ref, b2_ref,
                w3_ref, b3_ref,
                o_ref):
    """Fused 3-layer MLP (BN folded into W/b); one batch tile per grid step."""
    # Cast x f32 -> bf16 in-kernel (VPU) right before the MXU; avoids a whole
    # extra HBM pass over x in the wrapper.
    x = x_ref[...].astype(jnp.bfloat16)

    # Layer 1: Linear -> (folded BN) -> ReLU.  Dropout = identity (eval mode).
    h1 = jnp.dot(x, w1_ref[...], preferred_element_type=jnp.float32)
    h1 = jnp.maximum(h1 + b1_ref[...], 0.0).astype(jnp.bfloat16)

    # Layer 2: Linear -> (folded BN) -> ReLU.
    h2 = jnp.dot(h1, w2_ref[...], preferred_element_type=jnp.float32)
    h2 = jnp.maximum(h2 + b2_ref[...], 0.0).astype(jnp.bfloat16)

    # Layer 3: Linear -> (folded BN), no ReLU.
    h3 = jnp.dot(h2, w3_ref[...], preferred_element_type=jnp.float32)
    o_ref[...] = (h3 + b3_ref[...]).astype(o_ref.dtype)


# ----------------------------------------------------------------------------
# Wrapper
# ----------------------------------------------------------------------------
def _vmem_bytes_estimate(block_b, d_in, h1, h2, d_out, x_bytes, out_bytes):
    """Rough per-core VMEM footprint for one choice of batch tile."""
    # Double-buffered streamed tensors (x in, out).
    stream = 2 * block_b * d_in * x_bytes + 2 * block_b * d_out * out_bytes
    # Single-buffered resident bf16 weights + f32 bias rows.
    weights = 2 * (d_in * h1 + h1 * h2 + h2 * d_out) + 4 * (h1 + h2 + d_out)
    # In-kernel live intermediates: bf16 x copy, f32 acc + bf16 copy of h1/h2,
    # f32 h3.
    scratch = block_b * (2 * d_in + 6 * h1 + 6 * h2 + 4 * d_out)
    return stream + weights + scratch


def learned_projection_forward(x, folded_params, *, block_b=512,
                               out_dtype=jnp.float32,
                               vmem_cap_bytes=40 << 20):
    """Fused forward.  x: [B, input_dim] float32 (streamed once, cast in-kernel).

    block_b is the main tuning knob (sweep 256/512 on v7x, up to 1024 on v6e,
    ~256 on v5e).  On v7x prefer a block_b that makes cdiv(B, block_b) even so
    both TensorCores get equal work.
    """
    (w1, b1, w2, b2, w3, b3) = folded_params
    B, d_in = x.shape
    h1 = w1.shape[1]
    h2 = w2.shape[1]
    d_out = w3.shape[1]

    x_bytes = jnp.dtype(x.dtype).itemsize
    out_bytes = jnp.dtype(out_dtype).itemsize

    # Never tile larger than the (sublane-rounded) batch; keep multiples of 8.
    block_b = max(8, min(int(block_b) // 8 * 8, ((B + 7) // 8) * 8))
    # Shrink the tile until the estimated footprint fits the per-chip cap
    # (v7x has only 64 MiB physical VMEM; stay well under it).
    while block_b > 8 and _vmem_bytes_estimate(
            block_b, d_in, h1, h2, d_out, x_bytes, out_bytes) > vmem_cap_bytes:
        block_b = max(8, (block_b // 2) // 8 * 8)

    num_tiles = pl.cdiv(B, block_b)   # ragged last tile handled by Pallas

    est = _vmem_bytes_estimate(block_b, d_in, h1, h2, d_out, x_bytes, out_bytes)
    vmem_limit = int(min(max(2 * est, 32 << 20), 60 << 20))

    def row(v):
        return v.reshape(1, -1).astype(jnp.float32)

    def const_spec(m, n):
        # Constant across the grid -> single-buffer: fetched once, stays
        # resident, no double-buffer VMEM waste.
        return pl.BlockSpec((m, n), lambda i: (0, 0),
                            pipeline_mode=pl.Buffered(buffer_count=1))

    out = pl.pallas_call(
        _mlp_kernel,
        out_shape=jax.ShapeDtypeStruct((B, d_out), out_dtype),
        grid_spec=pl.GridSpec(
            grid=(num_tiles,),
            in_specs=[
                pl.BlockSpec((block_b, d_in), lambda i: (i, 0)),   # x (streamed)
                const_spec(d_in, h1), const_spec(1, h1),
                const_spec(h1, h2), const_spec(1, h2),
                const_spec(h2, d_out), const_spec(1, d_out),
            ],
            out_specs=pl.BlockSpec((block_b, d_out), lambda i: (i, 0)),
        ),
        compiler_params=pltpu.CompilerParams(
            dimension_semantics=("parallel",),   # megacore shards batch tiles
            vmem_limit_bytes=vmem_limit),
    )(x,
      w1, row(b1),
      w2, row(b2),
      w3, row(b3))
    return out


# ----------------------------------------------------------------------------
# Params (mirrors the PyTorch module __init__) + BN folding
# ----------------------------------------------------------------------------
def _xavier_uniform(key, fan_in, fan_out):
    bound = float(np.sqrt(6.0 / (fan_in + fan_out)))
    return jax.random.uniform(key, (fan_in, fan_out), jnp.float32, -bound, bound)


def init_params(key, input_dim, hidden_dim, output_dim):
    """Linear: Xavier-uniform weight, zero bias.
    BatchNorm1d (fresh): gamma=1, beta=0, running_mean=0, running_var=1."""
    k1, k2, k3 = jax.random.split(key, 3)
    h2 = hidden_dim // 2

    def layer(k, fi, fo):
        w = _xavier_uniform(k, fi, fo)
        b = jnp.zeros((fo,), jnp.float32)
        gamma = jnp.ones((fo,), jnp.float32)
        beta = jnp.zeros((fo,), jnp.float32)
        rmean = jnp.zeros((fo,), jnp.float32)
        rvar = jnp.ones((fo,), jnp.float32)
        return (w, b, gamma, beta, rmean, rvar)

    return (layer(k1, input_dim, hidden_dim),
            layer(k2, hidden_dim, h2),
            layer(k3, h2, output_dim))


def fold_params(params, weight_dtype=jnp.bfloat16):
    """Fold eval-mode BN into the Linear weights/biases.
    scale = gamma / sqrt(running_var + eps); shift = beta - running_mean*scale
    W' = W * scale (per output column);  b' = b * scale + shift."""
    folded = []
    for (w, b, gamma, beta, rmean, rvar) in params:
        scale = gamma / jnp.sqrt(rvar + BN_EPS)
        shift = beta - rmean * scale
        w_f = (w * scale[None, :]).astype(weight_dtype)
        b_f = (b * scale + shift).astype(jnp.float32)
        folded += [w_f, b_f]
    return tuple(folded)


def reference_forward(x, folded_params):
    """Pure-JAX reference (same folded weights, bf16 dot inputs, f32 accum)."""
    (w1, b1, w2, b2, w3, b3) = folded_params
    hp = jax.lax.Precision.HIGHEST

    def f32(a):
        return a.astype(jnp.float32)

    h = x.astype(jnp.bfloat16)
    h = jnp.maximum(jnp.dot(f32(h), f32(w1), precision=hp) + b1, 0.0).astype(jnp.bfloat16)
    h = jnp.maximum(jnp.dot(f32(h), f32(w2), precision=hp) + b2, 0.0).astype(jnp.bfloat16)
    return jnp.dot(f32(h), f32(w3), precision=hp) + b3


# ----------------------------------------------------------------------------
# Demo / self-test
# ----------------------------------------------------------------------------
if __name__ == "__main__":
    # Small shapes consistent with the module (scaled down from 4096/512/256).
    BATCH = 300          # NOT a multiple of block_b -> exercises ragged last tile
    INPUT_DIM = 512
    HIDDEN_DIM = 256     # hidden//2 = 128
    OUTPUT_DIM = 128     # multiple of 128 -> lane-dense output stores
    BLOCK_B = 256        # cdiv(300, 256) = 2 tiles (even -> balanced on v7x)

    key = jax.random.PRNGKey(0)
    kx, kp = jax.random.split(key)
    x = jax.random.normal(kx, (BATCH, INPUT_DIM), jnp.float32)
    params = init_params(kp, INPUT_DIM, HIDDEN_DIM, OUTPUT_DIM)
    folded = fold_params(params)

    out = jax.block_until_ready(
        learned_projection_forward(x, folded, block_b=BLOCK_B,
                                   out_dtype=jnp.float32))
    ref = jax.block_until_ready(reference_forward(x, folded))

    assert out.shape == (BATCH, OUTPUT_DIM)
    np.testing.assert_allclose(np.asarray(out), np.asarray(ref),
                               rtol=5e-3, atol=5e-3)
    print("KERNEL_OK")
</pallas_src>

<mosaic_0001>
module attributes {stable_mosaic.version = 11 : i64} {
  func.func @_mlp_kernel(%arg0: i32, %arg1: memref<256x512xf32, #tpu.memory_space<vmem>>, %arg2: memref<512x256xbf16, #tpu.memory_space<vmem>>, %arg3: memref<1x256xf32, #tpu.memory_space<vmem>>, %arg4: memref<256x128xbf16, #tpu.memory_space<vmem>>, %arg5: memref<1x128xf32, #tpu.memory_space<vmem>>, %arg6: memref<128x128xbf16, #tpu.memory_space<vmem>>, %arg7: memref<1x128xf32, #tpu.memory_space<vmem>>, %arg8: memref<256x128xf32, #tpu.memory_space<vmem>>) attributes {dimension_semantics = [#tpu.dimension_semantics<parallel>], iteration_bounds = array<i64: 2>, scalar_prefetch = 0 : i64, scratch_operands = 0 : i64, tpu.core_type = #tpu.core_type<tc>, window_params = [{transform_indices = @transform_0, window_bounds = array<i64: 256, 512>}, {pipeline_mode = #tpu.pipeline_mode<synchronous>, transform_indices = @transform_1, window_bounds = array<i64: 512, 256>}, {pipeline_mode = #tpu.pipeline_mode<synchronous>, transform_indices = @transform_2, window_bounds = array<i64: 1, 256>}, {pipeline_mode = #tpu.pipeline_mode<synchronous>, transform_indices = @transform_3, window_bounds = array<i64: 256, 128>}, {pipeline_mode = #tpu.pipeline_mode<synchronous>, transform_indices = @transform_4, window_bounds = array<i64: 1, 128>}, {pipeline_mode = #tpu.pipeline_mode<synchronous>, transform_indices = @transform_5, window_bounds = array<i64: 128, 128>}, {pipeline_mode = #tpu.pipeline_mode<synchronous>, transform_indices = @transform_6, window_bounds = array<i64: 1, 128>}, {transform_indices = @transform_7, window_bounds = array<i64: 256, 128>}]} {
    %c0 = arith.constant 0 : index
    %c0_0 = arith.constant 0 : index
    %0 = vector.load %arg1[%c0, %c0_0] : memref<256x512xf32, #tpu.memory_space<vmem>>, vector<256x512xf32>
    %1 = arith.truncf %0 : vector<256x512xf32> to vector<256x512xbf16>
    %c0_1 = arith.constant 0 : index
    %c0_2 = arith.constant 0 : index
    %2 = vector.load %arg2[%c0_1, %c0_2] : memref<512x256xbf16, #tpu.memory_space<vmem>>, vector<512x256xbf16>
    %cst = arith.constant dense<0.000000e+00> : vector<256x256xf32>
    %3 = tpu.matmul %1, %2, %cst {dimension_numbers = #tpu.dot_dimension_numbers<[1], [0], [0], [1], [0, 0, 1, 1], [], []>} : vector<256x512xbf16>, vector<512x256xbf16>, vector<256x256xf32> -> vector<256x256xf32>
    %c0_3 = arith.constant 0 : index
    %c0_4 = arith.constant 0 : index
    %4 = vector.load %arg3[%c0_3, %c0_4] : memref<1x256xf32, #tpu.memory_space<vmem>>, vector<1x256xf32>
    %5 = vector.broadcast %4 : vector<1x256xf32> to vector<256x256xf32>
    %6 = arith.addf %3, %5 : vector<256x256xf32>
    %cst_5 = arith.constant 0.000000e+00 : f32
    %7 = vector.broadcast %cst_5 : f32 to vector<256x256xf32>
    %8 = arith.maximumf %6, %7 : vector<256x256xf32>
    %9 = arith.truncf %8 : vector<256x256xf32> to vector<256x256xbf16>
    %c0_6 = arith.constant 0 : index
    %c0_7 = arith.constant 0 : index
    %10 = vector.load %arg4[%c0_6, %c0_7] : memref<256x128xbf16, #tpu.memory_space<vmem>>, vector<256x128xbf16>
    %cst_8 = arith.constant dense<0.000000e+00> : vector<256x128xf32>
    %11 = tpu.matmul %9, %10, %cst_8 {dimension_numbers = #tpu.dot_dimension_numbers<[1], [0], [0], [1], [0, 0, 1, 1], [], []>} : vector<256x256xbf16>, vector<256x128xbf16>, vector<256x128xf32> -> vector<256x128xf32>
    %c0_9 = arith.constant 0 : index
    %c0_10 = arith.constant 0 : index
    %12 = vector.load %arg5[%c0_9, %c0_10] : memref<1x128xf32, #tpu.memory_space<vmem>>, vector<1x128xf32>
    %13 = vector.broadcast %12 : vector<1x128xf32> to vector<256x128xf32>
    %14 = arith.addf %11, %13 : vector<256x128xf32>
    %cst_11 = arith.constant 0.000000e+00 : f32
    %15 = vector.broadcast %cst_11 : f32 to vector<256x128xf32>
    %16 = arith.maximumf %14, %15 : vector<256x128xf32>
    %17 = arith.truncf %16 : vector<256x128xf32> to vector<256x128xbf16>
    %c0_12 = arith.constant 0 : index
    %c0_13 = arith.constant 0 : index
    %18 = vector.load %arg6[%c0_12, %c0_13] : memref<128x128xbf16, #tpu.memory_space<vmem>>, vector<128x128xbf16>
    %cst_14 = arith.constant dense<0.000000e+00> : vector<256x128xf32>
    %19 = tpu.matmul %17, %18, %cst_14 {dimension_numbers = #tpu.dot_dimension_numbers<[1], [0], [0], [1], [0, 0, 1, 1], [], []>} : vector<256x128xbf16>, vector<128x128xbf16>, vector<256x128xf32> -> vector<256x128xf32>
    %c0_15 = arith.constant 0 : index
    %c0_16 = arith.constant 0 : index
    %20 = vector.load %arg7[%c0_15, %c0_16] : memref<1x128xf32, #tpu.memory_space<vmem>>, vector<1x128xf32>
    %21 = vector.broadcast %20 : vector<1x128xf32> to vector<256x128xf32>
    %22 = arith.addf %19, %21 : vector<256x128xf32>
    %c0_17 = arith.constant 0 : index
    %c0_18 = arith.constant 0 : index
    %23 = vector.load %arg8[%c0_17, %c0_18] : memref<256x128xf32, #tpu.memory_space<vmem>>, vector<256x128xf32>
    tpu.vector_store %arg8[%c0_17, %c0_18], %22 {strides = array<i32>} : memref<256x128xf32, #tpu.memory_space<vmem>>, vector<256x128xf32>,
    return
  }
  func.func @transform_0(%arg0: i32) -> (i32, i32) {
    %c0_i32 = arith.constant 0 : i32
    %c0_i32_0 = arith.constant 0 : i32
    return %arg0, %c0_i32 : i32, i32
  }
  func.func @transform_1(%arg0: i32) -> (i32, i32) {
    %c0_i32 = arith.constant 0 : i32
    %c0_i32_0 = arith.constant 0 : i32
    %c0_i32_1 = arith.constant 0 : i32
    return %c0_i32, %c0_i32_0 : i32, i32
  }
  func.func @transform_2(%arg0: i32) -> (i32, i32) {
    %c0_i32 = arith.constant 0 : i32
    %c0_i32_0 = arith.constant 0 : i32
    %c0_i32_1 = arith.constant 0 : i32
    return %c0_i32, %c0_i32_0 : i32, i32
  }
  func.func @transform_3(%arg0: i32) -> (i32, i32) {
    %c0_i32 = arith.constant 0 : i32
    %c0_i32_0 = arith.constant 0 : i32
    %c0_i32_1 = arith.constant 0 : i32
    return %c0_i32, %c0_i32_0 : i32, i32
  }
  func.func @transform_4(%arg0: i32) -> (i32, i32) {
    %c0_i32 = arith.constant 0 : i32
    %c0_i32_0 = arith.constant 0 : i32
    %c0_i32_1 = arith.constant 0 : i32
    return %c0_i32, %c0_i32_0 : i32, i32
  }
  func.func @transform_5(%arg0: i32) -> (i32, i32) {
    %c0_i32 = arith.constant 0 : i32
    %c0_i32_0 = arith.constant 0 : i32
    %c0_i32_1 = arith.constant 0 : i32
    return %c0_i32, %c0_i32_0 : i32, i32
  }
  func.func @transform_6(%arg0: i32) -> (i32, i32) {
    %c0_i32 = arith.constant 0 : i32
    %c0_i32_0 = arith.constant 0 : i32
    %c0_i32_1 = arith.constant 0 : i32
    return %c0_i32, %c0_i32_0 : i32, i32
  }
  func.func @transform_7(%arg0: i32) -> (i32, i32) {
    %c0_i32 = arith.constant 0 : i32
    %c0_i32_0 = arith.constant 0 : i32
    return %arg0, %c0_i32 : i32, i32
  }
}

</mosaic_0001>

<llo_original>
// kernel: tpu_custom_call.1
$region0: #{tpu_custom_call.1}
  #allocation0 [shape = 'u32[]', space=smem, size = 0x4, offset = 0x4, fixed_abs, tag = 'smem constant byte address 0x4 - core index']
  #allocation1 [shape = 'u32[144,128]{1,0:T(1,128)}', space=vmem, size = 0x12000, scoped, tag = 'internal scratch']
  %s0 = inlined_call_operand.hbm [shape: f32[300,512], index: 0, kind: input, shape index: {}]
  %s1 = inlined_call_operand.hbm [shape: bf16[512,256], index: 1, kind: input, shape index: {}]
  %s2 = inlined_call_operand.vmem [shape: f32[1,256], index: 2, kind: input, shape index: {}]
  %s3 = inlined_call_operand.hbm [shape: bf16[256,128], index: 3, kind: input, shape index: {}]
  %s4 = inlined_call_operand.vmem [shape: f32[1,128], index: 4, kind: input, shape index: {}]
  %s5 = inlined_call_operand.hbm [shape: bf16[128,128], index: 5, kind: input, shape index: {}]
  %s6 = inlined_call_operand.vmem [shape: f32[1,128], index: 6, kind: input, shape index: {}]
  %s7 = inlined_call_operand.hbm [shape: f32[300,128], index: 7, kind: output, shape index: {}]
  %s8 = sld [smem:[#allocation0]]
  $region77: #{tpu_custom_call.1} parent=0
    _
  %s10 = ssub.s32 1, %s8
  %s11 = scalar_select 0, %s10, %s8
  $region1: #{tpu_custom_call.1} parent=0
    #allocation2 [shape = 'u8[1048576]{0}', space=vmem, size = 0x100000, scoped, tag = 'input window, operand 0']
    #allocation3 [shape = 's32[2]{0}', space=sflag, size = 0x8, scoped, tag = 'scoped memory for tpu_custom_call.1']
    #allocation4 [shape = 's32[2]{0}', space=sflag, size = 0x8, scoped, tag = 'scoped memory for tpu_custom_call.1']
    #allocation5 [shape = 'u8[262144]{0}', space=vmem, size = 0x40000, scoped, tag = 'input window, operand 1, single buffered']
    #allocation6 [shape = 's32[1]{0}', space=sflag, size = 0x4, scoped, tag = 'scoped memory for tpu_custom_call.1']
    #allocation7 [shape = 'u8[65536]{0}', space=vmem, size = 0x10000, scoped, tag = 'input window, operand 3, single buffered']
    #allocation8 [shape = 'u8[32768]{0}', space=vmem, size = 0x8000, scoped, tag = 'input window, operand 5, single buffered']
    #allocation9 [shape = 's32[1]{0}', space=sflag, size = 0x4, scoped, tag = 'scoped memory for tpu_custom_call.1']
    #allocation10 [shape = 'u8[262144]{0}', space=vmem, size = 0x40000, scoped, tag = 'output window, operand 0']
    %12 = vsyncpa [#allocation3], 0
    %s13 = scalar_lea.sflag [#allocation3], 1
    %14 = vsyncpa %s13, 0
    %15 = vsyncpa [#allocation6], 0
    %16 = vsyncpa [#allocation9], 0
    %17 = vsyncpa [#allocation4], 0
    %s18 = scalar_lea.sflag [#allocation4], 1
    %19 = vsyncpa %s18, 0
    loop: start=0, step=1, limit=4
    $region2: #{tpu_custom_call.1} parent=1 // loop_pre_header
      _
    $region3: #{tpu_custom_call.1} parent=1 // loop_header
      %s21 = sphi 0, %s25
      %p22 = scmp.ge.s32.totalorder %s21, 4
      %s31 = sphi 0, %s33
      %s34 = sphi 0, %s31
      %s35 = sphi 0, %s34
      %s51 = sphi 0, %s35
      %s55 = sphi 0, %s55
      %s57 = sphi 0, %s55
      %s58 = sphi 0, %s57
      %s72 = sphi 0, %s58
      %s76 = sphi 0, %s76
      %s78 = sphi 0, %s76
      %s79 = sphi 0, %s78
      %s93 = sphi 0, %s79
      %s97 = sphi 0, %s97
      %s99 = sphi 0, %s97
      %s100 = sphi 0, %s99
      %s114 = sphi 0, %s100
      %s118 = sphi 0, %s118
      %s120 = sphi 0, %s118
      %s121 = sphi 0, %s120
      %s135 = sphi 0, %s121
      %s139 = sphi 0, %s139
      %s141 = sphi 0, %s139
      %s142 = sphi 0, %s141
      %s156 = sphi 0, %s142
      %s160 = sphi 0, %s160
      %s162 = sphi 0, %s160
      %s163 = sphi 0, %s162
      %s177 = sphi 0, %s163
      %s183 = sphi 0, %s185
      %s186 = sphi 0, %s183
      %s187 = sphi 0, %s186
      %s203 = sphi 0, %s187
    $region4: #{tpu_custom_call.1} parent=1 // loop_header_branch
      %24 = sbr.rel (%p22) target = $region8
    $region5: #{tpu_custom_call.1} parent=1 // loop_body
      %s26 = ssub.s32 %s21, 1
      %s27 = ssub.s32 %s21, 2
      %s28 = sadd.s32 %s21, 1
      %s29 = ssub.s32 %s21, %s28
      %p30 = scmp.eq.s32.totalorder %s29, 0
      %s32 = sadd.s32 %s31, 1
      %s33 = scalar_select %p30, %s31, %s32
      %p36 = pneg %p30
      %p37 = scmp.eq.s32.totalorder %s21, 1
      %p38 = por %p36, %p37
      %p39 = scmp.ne.s32.totalorder %s31, %s34
      %p40 = scmp.eq.s32.totalorder %s21, 0
      %p41 = por %p39, %p40
      %p42 = scmp.ne.s32.totalorder %s31, %s34
      %p43 = scmp.eq.s32.totalorder %s26, 1
      %p44 = por %p42, %p43
      %p45 = scmp.ne.s32.totalorder %s34, %s35
      %p46 = scmp.eq.s32.totalorder %s26, 0
      %p47 = por %p45, %p46
      %p48 = scmp.ne.s32.totalorder %s34, %s35
      %p49 = scmp.eq.s32.totalorder %s27, 1
      %p50 = por %p48, %p49
      %p52 = scmp.ne.s32.totalorder %s35, %s51
      %p53 = scmp.eq.s32.totalorder %s27, 0
      %p54 = por %p52, %p53
      %s56 = sadd.s32 %s55, 1
      %p59 = scmp.eq.s32.totalorder %s21, 1
      %p60 = scmp.ne.s32.totalorder %s55, %s57
      %p61 = scmp.eq.s32.totalorder %s21, 0
      %p62 = por %p60, %p61
      %p63 = scmp.ne.s32.totalorder %s55, %s57
      %p64 = scmp.eq.s32.totalorder %s26, 1
      %p65 = por %p63, %p64
      %p66 = scmp.ne.s32.totalorder %s57, %s58
      %p67 = scmp.eq.s32.totalorder %s26, 0
      %p68 = por %p66, %p67
      %p69 = scmp.ne.s32.totalorder %s57, %s58
      %p70 = scmp.eq.s32.totalorder %s27, 1
      %p71 = por %p69, %p70
      %p73 = scmp.ne.s32.totalorder %s58, %s72
      %p74 = scmp.eq.s32.totalorder %s27, 0
      %p75 = por %p73, %p74
      %s77 = sadd.s32 %s76, 1
      %p80 = scmp.eq.s32.totalorder %s21, 1
      %p81 = scmp.ne.s32.totalorder %s76, %s78
      %p82 = scmp.eq.s32.totalorder %s21, 0
      %p83 = por %p81, %p82
      %p84 = scmp.ne.s32.totalorder %s76, %s78
      %p85 = scmp.eq.s32.totalorder %s26, 1
      %p86 = por %p84, %p85
      %p87 = scmp.ne.s32.totalorder %s78, %s79
      %p88 = scmp.eq.s32.totalorder %s26, 0
      %p89 = por %p87, %p88
      %p90 = scmp.ne.s32.totalorder %s78, %s79
      %p91 = scmp.eq.s32.totalorder %s27, 1
      %p92 = por %p90, %p91
      %p94 = scmp.ne.s32.totalorder %s79, %s93
      %p95 = scmp.eq.s32.totalorder %s27, 0
      %p96 = por %p94, %p95
      %s98 = sadd.s32 %s97, 1
      %p101 = scmp.eq.s32.totalorder %s21, 1
      %p102 = scmp.ne.s32.totalorder %s97, %s99
      %p103 = scmp.eq.s32.totalorder %s21, 0
      %p104 = por %p102, %p103
      %p105 = scmp.ne.s32.totalorder %s97, %s99
      %p106 = scmp.eq.s32.totalorder %s26, 1
      %p107 = por %p105, %p106
      %p108 = scmp.ne.s32.totalorder %s99, %s100
      %p109 = scmp.eq.s32.totalorder %s26, 0
      %p110 = por %p108, %p109
      %p111 = scmp.ne.s32.totalorder %s99, %s100
      %p112 = scmp.eq.s32.totalorder %s27, 1
      %p113 = por %p111, %p112
      %p115 = scmp.ne.s32.totalorder %s100, %s114
      %p116 = scmp.eq.s32.totalorder %s27, 0
      %p117 = por %p115, %p116
      %s119 = sadd.s32 %s118, 1
      %p122 = scmp.eq.s32.totalorder %s21, 1
      %p123 = scmp.ne.s32.totalorder %s118, %s120
      %p124 = scmp.eq.s32.totalorder %s21, 0
      %p125 = por %p123, %p124
      %p126 = scmp.ne.s32.totalorder %s118, %s120
      %p127 = scmp.eq.s32.totalorder %s26, 1
      %p128 = por %p126, %p127
      %p129 = scmp.ne.s32.totalorder %s120, %s121
      %p130 = scmp.eq.s32.totalorder %s26, 0
      %p131 = por %p129, %p130
      %p132 = scmp.ne.s32.totalorder %s120, %s121
      %p133 = scmp.eq.s32.totalorder %s27, 1
      %p134 = por %p132, %p133
      %p136 = scmp.ne.s32.totalorder %s121, %s135
      %p137 = scmp.eq.s32.totalorder %s27, 0
      %p138 = por %p136, %p137
      %s140 = sadd.s32 %s139, 1
      %p143 = scmp.eq.s32.totalorder %s21, 1
      %p144 = scmp.ne.s32.totalorder %s139, %s141
      %p145 = scmp.eq.s32.totalorder %s21, 0
      %p146 = por %p144, %p145
      %p147 = scmp.ne.s32.totalorder %s139, %s141
      %p148 = scmp.eq.s32.totalorder %s26, 1
      %p149 = por %p147, %p148
      %p150 = scmp.ne.s32.totalorder %s141, %s142
      %p151 = scmp.eq.s32.totalorder %s26, 0
      %p152 = por %p150, %p151
      %p153 = scmp.ne.s32.totalorder %s141, %s142
      %p154 = scmp.eq.s32.totalorder %s27, 1
      %p155 = por %p153, %p154
      %p157 = scmp.ne.s32.totalorder %s142, %s156
      %p158 = scmp.eq.s32.totalorder %s27, 0
      %p159 = por %p157, %p158
      %s161 = sadd.s32 %s160, 1
      %p164 = scmp.eq.s32.totalorder %s21, 1
      %p165 = scmp.ne.s32.totalorder %s160, %s162
      %p166 = scmp.eq.s32.totalorder %s21, 0
      %p167 = por %p165, %p166
      %p168 = scmp.ne.s32.totalorder %s160, %s162
      %p169 = scmp.eq.s32.totalorder %s26, 1
      %p170 = por %p168, %p169
      %p171 = scmp.ne.s32.totalorder %s162, %s163
      %p172 = scmp.eq.s32.totalorder %s26, 0
      %p173 = por %p171, %p172
      %p174 = scmp.ne.s32.totalorder %s162, %s163
      %p175 = scmp.eq.s32.totalorder %s27, 1
      %p176 = por %p174, %p175
      %p178 = scmp.ne.s32.totalorder %s163, %s177
      %p179 = scmp.eq.s32.totalorder %s27, 0
      %p180 = por %p178, %p179
      %s181 = ssub.s32 %s21, %s28
      %p182 = scmp.eq.s32.totalorder %s181, 0
      %s184 = sadd.s32 %s183, 1
      %s185 = scalar_select %p182, %s183, %s184
      %p188 = pneg %p182
      %p189 = scmp.eq.s32.totalorder %s21, 1
      %p190 = por %p188, %p189
      %p191 = scmp.ne.s32.totalorder %s183, %s186
      %p192 = scmp.eq.s32.totalorder %s21, 0
      %p193 = por %p191, %p192
      %p194 = scmp.ne.s32.totalorder %s183, %s186
      %p195 = scmp.eq.s32.totalorder %s26, 1
      %p196 = por %p194, %p195
      %p197 = scmp.ne.s32.totalorder %s186, %s187
      %p198 = scmp.eq.s32.totalorder %s26, 0
      %p199 = por %p197, %p198
      %p200 = scmp.ne.s32.totalorder %s186, %s187
      %p201 = scmp.eq.s32.totalorder %s27, 1
      %p202 = por %p200, %p201
      %p204 = scmp.ne.s32.totalorder %s187, %s203
      %p205 = scmp.eq.s32.totalorder %s27, 0
      %p206 = por %p204, %p205
      %p207 = scmp.le.s32.totalorder 1, %s21
      %p208 = scmp.lt.s32.totalorder %s21, 3
      %p209 = pnand %p207, %p208
      %p210 = pneg %p209
      // Predicated region
      $region9: #{tpu_custom_call.1} parent=5 // pred_check
        _
      $region10: #{tpu_custom_call.1} parent=5 // pred_check_branch
        %212 = sbr.rel (%p209) target = $region12
      $region11: #{tpu_custom_call.1} parent=5 // pred_region
        %s213 = ssub.s32 %s21, 1
        // Predicated region
        $region13: #{tpu_custom_call.1} parent=11 // pred_check
          %p214 = pneg %p68
        $region14: #{tpu_custom_call.1} parent=11 // pred_check_branch
          %216 = sbr.rel (%p214) target = $region16
        $region15: #{tpu_custom_call.1} parent=11 // pred_region
          %s218 = ssub.s32 8192, 8192
          %219 = vsyncadd [#allocation6], %s218
          %s220 = sshll.u32 [#allocation5], 4
          %s221 = int_to_ptr.vmem [resolvable:$true] %s220
          %226 = dma.hbm_to_vmem [thread:$0]  %s1, 8192, %s221, [#allocation6], 128, 128, 8
        $region16: #{tpu_custom_call.1} parent=11 // pred_fallthru
          _
        // Predicated region
        $region17: #{tpu_custom_call.1} parent=11 // pred_check
          %p227 = pneg %p89
        $region18: #{tpu_custom_call.1} parent=11 // pred_check_branch
          %229 = sbr.rel (%p227) target = $region20
        $region19: #{tpu_custom_call.1} parent=11 // pred_region
          _
        $region20: #{tpu_custom_call.1} parent=11 // pred_fallthru
          _
        // Predicated region
        $region21: #{tpu_custom_call.1} parent=11 // pred_check
          %p230 = pneg %p110
        $region22: #{tpu_custom_call.1} parent=11 // pred_check_branch
          %232 = sbr.rel (%p230) target = $region24
        $region23: #{tpu_custom_call.1} parent=11 // pred_region
          %s234 = ssub.s32 2048, 2048
          %235 = vsyncadd [#allocation6], %s234
          %s236 = sshll.u32 [#allocation7], 4
          %s237 = int_to_ptr.vmem [resolvable:$true] %s236
          %242 = dma.hbm_to_vmem [thread:$0]  %s3, 2048, %s237, [#allocation6], 64, 64, 4
        $region24: #{tpu_custom_call.1} parent=11 // pred_fallthru
          _
        // Predicated region
        $region25: #{tpu_custom_call.1} parent=11 // pred_check
          %p243 = pneg %p131
        $region26: #{tpu_custom_call.1} parent=11 // pred_check_branch
          %245 = sbr.rel (%p243) target = $region28
        $region27: #{tpu_custom_call.1} parent=11 // pred_region
          _
        $region28: #{tpu_custom_call.1} parent=11 // pred_fallthru
          _
        // Predicated region
        $region29: #{tpu_custom_call.1} parent=11 // pred_check
          %p246 = pneg %p152
        $region30: #{tpu_custom_call.1} parent=11 // pred_check_branch
          %248 = sbr.rel (%p246) target = $region32
        $region31: #{tpu_custom_call.1} parent=11 // pred_region
          %s250 = ssub.s32 1024, 1024
          %251 = vsyncadd [#allocation9], %s250
          %s252 = sshll.u32 [#allocation8], 4
          %s253 = int_to_ptr.vmem [resolvable:$true] %s252
          %258 = dma.hbm_to_vmem [thread:$0]  %s5, 1024, %s253, [#allocation9], 64, 64, 4
        $region32: #{tpu_custom_call.1} parent=11 // pred_fallthru
          _
        // Predicated region
        $region33: #{tpu_custom_call.1} parent=11 // pred_check
          %p259 = pneg %p173
        $region34: #{tpu_custom_call.1} parent=11 // pred_check_branch
          %261 = sbr.rel (%p259) target = $region36
        $region35: #{tpu_custom_call.1} parent=11 // pred_region
          _
        $region36: #{tpu_custom_call.1} parent=11 // pred_fallthru
          _
      $region12: #{tpu_custom_call.1} parent=5 // pred_fallthru
        _
      %p262 = scmp.lt.s32.totalorder %s21, 2
      // Predicated region
      $region37: #{tpu_custom_call.1} parent=5 // pred_check
        %p263 = pneg %p262
      $region38: #{tpu_custom_call.1} parent=5 // pred_check_branch
        %265 = sbr.rel (%p263) target = $region40
      $region39: #{tpu_custom_call.1} parent=5 // pred_region
        // Predicated region
        $region41: #{tpu_custom_call.1} parent=39 // pred_check
          %p266 = pneg %p41
        $region42: #{tpu_custom_call.1} parent=39 // pred_check_branch
          %268 = sbr.rel (%p266) target = $region44
        $region43: #{tpu_custom_call.1} parent=39 // pred_region
          %s269 = sand.u32 %s31, 1
          %s270 = scalar_lea.sflag [#allocation3], %s269
          %s271 = sand.u32 %s31, 1
          %s272 = smul.addr %s271, 1024
          %s273 = scalar_lea.vmem [#allocation2], %s272
          %s274 = smul.u32 32, %s21
          %s275 = ssub.s32 38, %s274
          %p276 = scmp.lt.s32.totalorder %s275, 32
          %s277 = scalar_select %p276, %s275, 32
          %s278 = smul.u32 128, %s277
          %s279 = smul.u32 %s278, 4
          %s281 = ssub.s32 16384, %s279
          %282 = vsyncadd %s270, %s281
          %p283 = scmp.ne.s32.totalorder 0, %s279
          %s284 = smul.addr %s274, 4
          %s285 = smul.addr %s284, 128
          %s286 = scalar_lea.hbm %s0, %s285
          %s287 = smul.u32 32, %s277
          %s288 = sshll.u32 %s273, 4
          %s289 = int_to_ptr.vmem [resolvable:$true] %s288
          %s290 = sshll.u32 %s287, 4
          %294 = dma.hbm_to_vmem [thread:$0]  (%p283), %s286, %s290, %s289, %s270, 512, 512, 32
        $region44: #{tpu_custom_call.1} parent=39 // pred_fallthru
          _
      $region40: #{tpu_custom_call.1} parent=5 // pred_fallthru
        _
      %p295 = scmp.le.s32.totalorder 1, %s21
      %p296 = scmp.lt.s32.totalorder %s21, 3
      %p297 = pnand %p295, %p296
      %p298 = pneg %p297
      // Predicated region
      $region45: #{tpu_custom_call.1} parent=5 // pred_check
        _
      $region46: #{tpu_custom_call.1} parent=5 // pred_check_branch
        %300 = sbr.rel (%p297) target = $region48
      $region47: #{tpu_custom_call.1} parent=5 // pred_region
        %s301 = ssub.s32 %s21, 1
        %s302 = sand.u32 %s34, 1
        %s303 = scalar_lea.sflag [#allocation3], %s302
        %s304 = sand.u32 %s34, 1
        %s305 = smul.addr %s304, 1024
        %s306 = scalar_lea.vmem [#allocation2], %s305
        // Predicated region
        $region49: #{tpu_custom_call.1} parent=47 // pred_check
          %p307 = pneg %p47
        $region50: #{tpu_custom_call.1} parent=47 // pred_check_branch
          %309 = sbr.rel (%p307) target = $region52
        $region51: #{tpu_custom_call.1} parent=47 // pred_region
          %310 = dma.done %s303, 16384
        $region52: #{tpu_custom_call.1} parent=47 // pred_fallthru
          _
        // Predicated region
        $region53: #{tpu_custom_call.1} parent=47 // pred_check
          %p311 = pneg %p68
        $region54: #{tpu_custom_call.1} parent=47 // pred_check_branch
          %313 = sbr.rel (%p311) target = $region56
        $region55: #{tpu_custom_call.1} parent=47 // pred_region
          %314 = dma.done [#allocation6], 8192
        $region56: #{tpu_custom_call.1} parent=47 // pred_fallthru
          _
        // Predicated region
        $region57: #{tpu_custom_call.1} parent=47 // pred_check
          %p315 = pneg %p110
        $region58: #{tpu_custom_call.1} parent=47 // pred_check_branch
          %317 = sbr.rel (%p315) target = $region60
        $region59: #{tpu_custom_call.1} parent=47 // pred_region
          %318 = dma.done [#allocation6], 2048
        $region60: #{tpu_custom_call.1} parent=47 // pred_fallthru
          _
        // Predicated region
        $region61: #{tpu_custom_call.1} parent=47 // pred_check
          %p319 = pneg %p152
        $region62: #{tpu_custom_call.1} parent=47 // pred_check_branch
          %321 = sbr.rel (%p319) target = $region64
        $region63: #{tpu_custom_call.1} parent=47 // pred_region
          %322 = dma.done [#allocation9], 1024
        $region64: #{tpu_custom_call.1} parent=47 // pred_fallthru
          _
        %s323 = sand.u32 %s34, 1
        %s324 = scalar_lea.sflag [#allocation3], %s323
        %s325 = sand.u32 %s34, 1
        %s326 = smul.addr %s325, 1024
        %s327 = scalar_lea.vmem [#allocation2], %s326
        %p328 = pneg %p47
        %p329 = pneg %p44
        %p330 = pneg %p68
        %p331 = pneg %p65
        %p332 = pneg %p89
        %p333 = pneg %p86
        %p334 = pneg %p110
        %p335 = pneg %p107
        %p336 = pneg %p131
        %p337 = pneg %p128
        %p338 = pneg %p152
        %p339 = pneg %p149
        %p340 = pneg %p173
        %p341 = pneg %p170
        %p342 = pneg %p199
        %p343 = pneg %p196
        %s344 = sand.u32 %s186, 1
        %s345 = scalar_lea.sflag [#allocation4], %s344
        %s346 = sand.u32 %s186, 1
        %s347 = smul.addr %s346, 256
        %s348 = scalar_lea.vmem [#allocation10], %s347
        %s349 = smul.u32 32, %s26
        %s350 = ssub.s32 38, %s349
        %p351 = scmp.lt.s32.totalorder %s350, 32
        %s352 = scalar_select %p351, %s350, 32
        %s353 = smul.u32 128, %s352
        %s354 = smul.u32 %s353, 4
        %s355 = smul.u32 32, %s26
        %s356 = ssub.s32 38, %s355
        %p357 = scmp.lt.s32.totalorder %s356, 32
        %s358 = scalar_select %p357, %s356, 32
        %s359 = smul.u32 128, %s358
        %v361 = vld [vmem:[%s306] sm:$0xff]
        %v362 = vld [vmem:[%s306 + $0x8] sm:$0xff]
        %v363 = vld [vmem:[%s306 + $0x10] sm:$0xff]
        %v364 = vld [vmem:[%s306 + $0x18] sm:$0xff]
        %v365 = vld [vmem:[%s306 + $0x20] sm:$0xff]
        %v366 = vld [vmem:[%s306 + $0x28] sm:$0xff]
        %v367 = vld [vmem:[%s306 + $0x30] sm:$0xff]
        %v368 = vld [vmem:[%s306 + $0x38] sm:$0xff]
        %v369 = vld [vmem:[%s306 + $0x40] sm:$0xff]
        %v370 = vld [vmem:[%s306 + $0x48] sm:$0xff]
        %v371 = vld [vmem:[%s306 + $0x50] sm:$0xff]
        %v372 = vld [vmem:[%s306 + $0x58] sm:$0xff]
        %v373 = vld [vmem:[%s306 + $0x60] sm:$0xff]
        %v374 = vld [vmem:[%s306 + $0x68] sm:$0xff]
        %v375 = vld [vmem:[%s306 + $0x70] sm:$0xff]
        %v376 = vld [vmem:[%s306 + $0x78] sm:$0xff]
        %v377 = vld [vmem:[%s306 + $0x80] sm:$0xff]
        %v378 = vld [vmem:[%s306 + $0x88] sm:$0xff]
        %v379 = vld [vmem:[%s306 + $0x90] sm:$0xff]
        %v380 = vld [vmem:[%s306 + $0x98] sm:$0xff]
        %v381 = vld [vmem:[%s306 + $0xa0] sm:$0xff]
        %v382 = vld [vmem:[%s306 + $0xa8] sm:$0xff]
        %v383 = vld [vmem:[%s306 + $0xb0] sm:$0xff]
        %v384 = vld [vmem:[%s306 + $0xb8] sm:$0xff]
        %v385 = vld [vmem:[%s306 + $0xc0] sm:$0xff]
        %v386 = vld [vmem:[%s306 + $0xc8] sm:$0xff]
        %v387 = vld [vmem:[%s306 + $0xd0] sm:$0xff]
        %v388 = vld [vmem:[%s306 + $0xd8] sm:$0xff]
        %v389 = vld [vmem:[%s306 + $0xe0] sm:$0xff]
        %v390 = vld [vmem:[%s306 + $0xe8] sm:$0xff]
        %v391 = vld [vmem:[%s306 + $0xf0] sm:$0xff]
        %v392 = vld [vmem:[%s306 + $0xf8] sm:$0xff]
        %v393 = vld [vmem:[%s306 + $0x100] sm:$0xff]
        %v394 = vld [vmem:[%s306 + $0x108] sm:$0xff]
        %v395 = vld [vmem:[%s306 + $0x110] sm:$0xff]
        %v396 = vld [vmem:[%s306 + $0x118] sm:$0xff]
        %v397 = vld [vmem:[%s306 + $0x120] sm:$0xff]
        %v398 = vld [vmem:[%s306 + $0x128] sm:$0xff]
        %v399 = vld [vmem:[%s306 + $0x130] sm:$0xff]
        %v400 = vld [vmem:[%s306 + $0x138] sm:$0xff]
        %v401 = vld [vmem:[%s306 + $0x140] sm:$0xff]
        %v402 = vld [vmem:[%s306 + $0x148] sm:$0xff]
        %v403 = vld [vmem:[%s306 + $0x150] sm:$0xff]
        %v404 = vld [vmem:[%s306 + $0x158] sm:$0xff]
        %v405 = vld [vmem:[%s306 + $0x160] sm:$0xff]
        %v406 = vld [vmem:[%s306 + $0x168] sm:$0xff]
        %v407 = vld [vmem:[%s306 + $0x170] sm:$0xff]
        %v408 = vld [vmem:[%s306 + $0x178] sm:$0xff]
        %v409 = vld [vmem:[%s306 + $0x180] sm:$0xff]
        %v410 = vld [vmem:[%s306 + $0x188] sm:$0xff]
        %v411 = vld [vmem:[%s306 + $0x190] sm:$0xff]
        %v412 = vld [vmem:[%s306 + $0x198] sm:$0xff]
        %v413 = vld [vmem:[%s306 + $0x1a0] sm:$0xff]
        %v414 = vld [vmem:[%s306 + $0x1a8] sm:$0xff]
        %v415 = vld [vmem:[%s306 + $0x1b0] sm:$0xff]
        %v416 = vld [vmem:[%s306 + $0x1b8] sm:$0xff]
        %v417 = vld [vmem:[%s306 + $0x1c0] sm:$0xff]
        %v418 = vld [vmem:[%s306 + $0x1c8] sm:$0xff]
        %v419 = vld [vmem:[%s306 + $0x1d0] sm:$0xff]
        %v420 = vld [vmem:[%s306 + $0x1d8] sm:$0xff]
        %v421 = vld [vmem:[%s306 + $0x1e0] sm:$0xff]
        %v422 = vld [vmem:[%s306 + $0x1e8] sm:$0xff]
        %v423 = vld [vmem:[%s306 + $0x1f0] sm:$0xff]
        %v424 = vld [vmem:[%s306 + $0x1f8] sm:$0xff]
        %v425 = vld [vmem:[%s306 + $0x200] sm:$0xff]
        %v426 = vld [vmem:[%s306 + $0x208] sm:$0xff]
        %v427 = vld [vmem:[%s306 + $0x210] sm:$0xff]
        %v428 = vld [vmem:[%s306 + $0x218] sm:$0xff]
        %v429 = vld [vmem:[%s306 + $0x220] sm:$0xff]
        %v430 = vld [vmem:[%s306 + $0x228] sm:$0xff]
        %v431 = vld [vmem:[%s306 + $0x230] sm:$0xff]
        %v432 = vld [vmem:[%s306 + $0x238] sm:$0xff]
        %v433 = vld [vmem:[%s306 + $0x240] sm:$0xff]
        %v434 = vld [vmem:[%s306 + $0x248] sm:$0xff]
        %v435 = vld [vmem:[%s306 + $0x250] sm:$0xff]
        %v436 = vld [vmem:[%s306 + $0x258] sm:$0xff]
        %v437 = vld [vmem:[%s306 + $0x260] sm:$0xff]
        %v438 = vld [vmem:[%s306 + $0x268] sm:$0xff]
        %v439 = vld [vmem:[%s306 + $0x270] sm:$0xff]
        %v440 = vld [vmem:[%s306 + $0x278] sm:$0xff]
        %v441 = vld [vmem:[%s306 + $0x280] sm:$0xff]
        %v442 = vld [vmem:[%s306 + $0x288] sm:$0xff]
        %v443 = vld [vmem:[%s306 + $0x290] sm:$0xff]
        %v444 = vld [vmem:[%s306 + $0x298] sm:$0xff]
        %v445 = vld [vmem:[%s306 + $0x2a0] sm:$0xff]
        %v446 = vld [vmem:[%s306 + $0x2a8] sm:$0xff]
        %v447 = vld [vmem:[%s306 + $0x2b0] sm:$0xff]
        %v448 = vld [vmem:[%s306 + $0x2b8] sm:$0xff]
        %v449 = vld [vmem:[%s306 + $0x2c0] sm:$0xff]
        %v450 = vld [vmem:[%s306 + $0x2c8] sm:$0xff]
        %v451 = vld [vmem:[%s306 + $0x2d0] sm:$0xff]
        %v452 = vld [vmem:[%s306 + $0x2d8] sm:$0xff]
        %v453 = vld [vmem:[%s306 + $0x2e0] sm:$0xff]
        %v454 = vld [vmem:[%s306 + $0x2e8] sm:$0xff]
        %v455 = vld [vmem:[%s306 + $0x2f0] sm:$0xff]
        %v456 = vld [vmem:[%s306 + $0x2f8] sm:$0xff]
        %v457 = vld [vmem:[%s306 + $0x300] sm:$0xff]
        %v458 = vld [vmem:[%s306 + $0x308] sm:$0xff]
        %v459 = vld [vmem:[%s306 + $0x310] sm:$0xff]
        %v460 = vld [vmem:[%s306 + $0x318] sm:$0xff]
        %v461 = vld [vmem:[%s306 + $0x320] sm:$0xff]
        %v462 = vld [vmem:[%s306 + $0x328] sm:$0xff]
        %v463 = vld [vmem:[%s306 + $0x330] sm:$0xff]
        %v464 = vld [vmem:[%s306 + $0x338] sm:$0xff]
        %v465 = vld [vmem:[%s306 + $0x340] sm:$0xff]
        %v466 = vld [vmem:[%s306 + $0x348] sm:$0xff]
        %v467 = vld [vmem:[%s306 + $0x350] sm:$0xff]
        %v468 = vld [vmem:[%s306 + $0x358] sm:$0xff]
        %v469 = vld [vmem:[%s306 + $0x360] sm:$0xff]
        %v470 = vld [vmem:[%s306 + $0x368] sm:$0xff]
        %v471 = vld [vmem:[%s306 + $0x370] sm:$0xff]
        %v472 = vld [vmem:[%s306 + $0x378] sm:$0xff]
        %v473 = vld [vmem:[%s306 + $0x380] sm:$0xff]
        %v474 = vld [vmem:[%s306 + $0x388] sm:$0xff]
        %v475 = vld [vmem:[%s306 + $0x390] sm:$0xff]
        %v476 = vld [vmem:[%s306 + $0x398] sm:$0xff]
        %v477 = vld [vmem:[%s306 + $0x3a0] sm:$0xff]
        %v478 = vld [vmem:[%s306 + $0x3a8] sm:$0xff]
        %v479 = vld [vmem:[%s306 + $0x3b0] sm:$0xff]
        %v480 = vld [vmem:[%s306 + $0x3b8] sm:$0xff]
        %v481 = vld [vmem:[%s306 + $0x3c0] sm:$0xff]
        %v482 = vld [vmem:[%s306 + $0x3c8] sm:$0xff]
        %v483 = vld [vmem:[%s306 + $0x3d0] sm:$0xff]
        %v484 = vld [vmem:[%s306 + $0x3d8] sm:$0xff]
        %v485 = vld [vmem:[%s306 + $0x3e0] sm:$0xff]
        %v486 = vld [vmem:[%s306 + $0x3e8] sm:$0xff]
        %v487 = vld [vmem:[%s306 + $0x3f0] sm:$0xff]
        %v488 = vld [vmem:[%s306 + $0x3f8] sm:$0xff]
        %v489 = vpack.c.bf16 %v365, %v361
        %v490 = vpack.c.bf16 %v366, %v362
        %v491 = vpack.c.bf16 %v367, %v363
        %v492 = vpack.c.bf16 %v368, %v364
        %v493 = vpack.c.bf16 %v373, %v369
        %v494 = vpack.c.bf16 %v374, %v370
        %v495 = vpack.c.bf16 %v375, %v371
        %v496 = vpack.c.bf16 %v376, %v372
        %v497 = vpack.c.bf16 %v381, %v377
        %v498 = vpack.c.bf16 %v382, %v378
        %v499 = vpack.c.bf16 %v383, %v379
        %v500 = vpack.c.bf16 %v384, %v380
        %v501 = vpack.c.bf16 %v389, %v385
        %v502 = vpack.c.bf16 %v390, %v386
        %v503 = vpack.c.bf16 %v391, %v387
        %v504 = vpack.c.bf16 %v392, %v388
        %v505 = vpack.c.bf16 %v397, %v393
        %v506 = vpack.c.bf16 %v398, %v394
        %v507 = vpack.c.bf16 %v399, %v395
        %v508 = vpack.c.bf16 %v400, %v396
        %v509 = vpack.c.bf16 %v405, %v401
        %v510 = vpack.c.bf16 %v406, %v402
        %v511 = vpack.c.bf16 %v407, %v403
        %v512 = vpack.c.bf16 %v408, %v404
        %v513 = vpack.c.bf16 %v413, %v409
        %v514 = vpack.c.bf16 %v414, %v410
        %v515 = vpack.c.bf16 %v415, %v411
        %v516 = vpack.c.bf16 %v416, %v412
        %v517 = vpack.c.bf16 %v421, %v417
        %v518 = vpack.c.bf16 %v422, %v418
        %v519 = vpack.c.bf16 %v423, %v419
        %v520 = vpack.c.bf16 %v424, %v420
        %v521 = vpack.c.bf16 %v429, %v425
        %v522 = vpack.c.bf16 %v430, %v426
        %v523 = vpack.c.bf16 %v431, %v427
        %v524 = vpack.c.bf16 %v432, %v428
        %v525 = vpack.c.bf16 %v437, %v433
        %v526 = vpack.c.bf16 %v438, %v434
        %v527 = vpack.c.bf16 %v439, %v435
        %v528 = vpack.c.bf16 %v440, %v436
        %v529 = vpack.c.bf16 %v445, %v441
        %v530 = vpack.c.bf16 %v446, %v442
        %v531 = vpack.c.bf16 %v447, %v443
        %v532 = vpack.c.bf16 %v448, %v444
        %v533 = vpack.c.bf16 %v453, %v449
        %v534 = vpack.c.bf16 %v454, %v450
        %v535 = vpack.c.bf16 %v455, %v451
        %v536 = vpack.c.bf16 %v456, %v452
        %v537 = vpack.c.bf16 %v461, %v457
        %v538 = vpack.c.bf16 %v462, %v458
        %v539 = vpack.c.bf16 %v463, %v459
        %v540 = vpack.c.bf16 %v464, %v460
        %v541 = vpack.c.bf16 %v469, %v465
        %v542 = vpack.c.bf16 %v470, %v466
        %v543 = vpack.c.bf16 %v471, %v467
        %v544 = vpack.c.bf16 %v472, %v468
        %v545 = vpack.c.bf16 %v477, %v473
        %v546 = vpack.c.bf16 %v478, %v474
        %v547 = vpack.c.bf16 %v479, %v475
        %v548 = vpack.c.bf16 %v480, %v476
        %v549 = vpack.c.bf16 %v485, %v481
        %v550 = vpack.c.bf16 %v486, %v482
        %v551 = vpack.c.bf16 %v487, %v483
        %v552 = vpack.c.bf16 %v488, %v484
        %v553 = vld [vmem:[#allocation5] sm:$0xff]
        %v554 = vld [vmem:[#allocation5 + $0x8] sm:$0xff]
        %v555 = vld [vmem:[#allocation5 + $0x10] sm:$0xff]
        %v556 = vld [vmem:[#allocation5 + $0x18] sm:$0xff]
        %v557 = vld [vmem:[#allocation5 + $0x20] sm:$0xff]
        %v558 = vld [vmem:[#allocation5 + $0x28] sm:$0xff]
        %v559 = vld [vmem:[#allocation5 + $0x30] sm:$0xff]
        %v560 = vld [vmem:[#allocation5 + $0x38] sm:$0xff]
        %v561 = vld [vmem:[#allocation5 + $0x40] sm:$0xff]
        %v562 = vld [vmem:[#allocation5 + $0x48] sm:$0xff]
        %v563 = vld [vmem:[#allocation5 + $0x50] sm:$0xff]
        %v564 = vld [vmem:[#allocation5 + $0x58] sm:$0xff]
        %v565 = vld [vmem:[#allocation5 + $0x60] sm:$0xff]
        %v566 = vld [vmem:[#allocation5 + $0x68] sm:$0xff]
        %v567 = vld [vmem:[#allocation5 + $0x70] sm:$0xff]
        %v568 = vld [vmem:[#allocation5 + $0x78] sm:$0xff]
        %v569 = vld [vmem:[#allocation5 + $0x80] sm:$0xff]
        %v570 = vld [vmem:[#allocation5 + $0x88] sm:$0xff]
        %v571 = vld [vmem:[#allocation5 + $0x90] sm:$0xff]
        %v572 = vld [vmem:[#allocation5 + $0x98] sm:$0xff]
        %v573 = vld [vmem:[#allocation5 + $0xa0] sm:$0xff]
        %v574 = vld [vmem:[#allocation5 + $0xa8] sm:$0xff]
        %v575 = vld [vmem:[#allocation5 + $0xb0] sm:$0xff]
        %v576 = vld [vmem:[#allocation5 + $0xb8] sm:$0xff]
        %v577 = vld [vmem:[#allocation5 + $0xc0] sm:$0xff]
        %v578 = vld [vmem:[#allocation5 + $0xc8] sm:$0xff]
        %v579 = vld [vmem:[#allocation5 + $0xd0] sm:$0xff]
        %v580 = vld [vmem:[#allocation5 + $0xd8] sm:$0xff]
        %v581 = vld [vmem:[#allocation5 + $0xe0] sm:$0xff]
        %v582 = vld [vmem:[#allocation5 + $0xe8] sm:$0xff]
        %v583 = vld [vmem:[#allocation5 + $0xf0] sm:$0xff]
        %v584 = vld [vmem:[#allocation5 + $0xf8] sm:$0xff]
        %v585 = vld [vmem:[#allocation5 + $0x100] sm:$0xff]
        %v586 = vld [vmem:[#allocation5 + $0x108] sm:$0xff]
        %v587 = vld [vmem:[#allocation5 + $0x110] sm:$0xff]
        %v588 = vld [vmem:[#allocation5 + $0x118] sm:$0xff]
        %v589 = vld [vmem:[#allocation5 + $0x120] sm:$0xff]
        %v590 = vld [vmem:[#allocation5 + $0x128] sm:$0xff]
        %v591 = vld [vmem:[#allocation5 + $0x130] sm:$0xff]
        %v592 = vld [vmem:[#allocation5 + $0x138] sm:$0xff]
        %v593 = vld [vmem:[#allocation5 + $0x140] sm:$0xff]
        %v594 = vld [vmem:[#allocation5 + $0x148] sm:$0xff]
        %v595 = vld [vmem:[#allocation5 + $0x150] sm:$0xff]
        %v596 = vld [vmem:[#allocation5 + $0x158] sm:$0xff]
        %v597 = vld [vmem:[#allocation5 + $0x160] sm:$0xff]
        %v598 = vld [vmem:[#allocation5 + $0x168] sm:$0xff]
        %v599 = vld [vmem:[#allocation5 + $0x170] sm:$0xff]
        %v600 = vld [vmem:[#allocation5 + $0x178] sm:$0xff]
        %v601 = vld [vmem:[#allocation5 + $0x180] sm:$0xff]
        %v602 = vld [vmem:[#allocation5 + $0x188] sm:$0xff]
        %v603 = vld [vmem:[#allocation5 + $0x190] sm:$0xff]
        %v604 = vld [vmem:[#allocation5 + $0x198] sm:$0xff]
        %v605 = vld [vmem:[#allocation5 + $0x1a0] sm:$0xff]
        %v606 = vld [vmem:[#allocation5 + $0x1a8] sm:$0xff]
        %v607 = vld [vmem:[#allocation5 + $0x1b0] sm:$0xff]
        %v608 = vld [vmem:[#allocation5 + $0x1b8] sm:$0xff]
        %v609 = vld [vmem:[#allocation5 + $0x1c0] sm:$0xff]
        %v610 = vld [vmem:[#allocation5 + $0x1c8] sm:$0xff]
        %v611 = vld [vmem:[#allocation5 + $0x1d0] sm:$0xff]
        %v612 = vld [vmem:[#allocation5 + $0x1d8] sm:$0xff]
        %v613 = vld [vmem:[#allocation5 + $0x1e0] sm:$0xff]
        %v614 = vld [vmem:[#allocation5 + $0x1e8] sm:$0xff]
        %v615 = vld [vmem:[#allocation5 + $0x1f0] sm:$0xff]
        %v616 = vld [vmem:[#allocation5 + $0x1f8] sm:$0xff]
        %v617 = vld [vmem:[%s2] sm:$0x3]
        %v619 = vlaneseq
        %v620 = vshrl.u32 %v619, 7
        %v621 = vsub.s32 0, %v620
        %v622 = vrot.slane %v617, %v621
        %v623 = vlaneseq
        %v624 = vshrl.u32 %v623, 7
        %v625 = vsub.s32 1, %v624
        %v626 = vrot.slane %v617, %v625
        %v693 = vunpack.c.l.b16 %v553
        %v694 = vunpack.c.h.b16 %v553
        %v695 = vunpack.c.l.b16 %v554
        %v696 = vunpack.c.h.b16 %v554
        %v697 = vunpack.c.l.b16 %v555
        %v698 = vunpack.c.h.b16 %v555
        %v699 = vunpack.c.l.b16 %v556
        %v700 = vunpack.c.h.b16 %v556
        %v701 = vunpack.c.l.b16 %v557
        %v702 = vunpack.c.h.b16 %v557
        %v703 = vunpack.c.l.b16 %v558
        %v704 = vunpack.c.h.b16 %v558
        %v705 = vunpack.c.l.b16 %v559
        %v706 = vunpack.c.h.b16 %v559
        %v707 = vunpack.c.l.b16 %v560
        %v708 = vunpack.c.h.b16 %v560
        %v709 = vunpack.c.l.b16 %v561
        %v710 = vunpack.c.h.b16 %v561
        %v711 = vunpack.c.l.b16 %v562
        %v712 = vunpack.c.h.b16 %v562
        %v713 = vunpack.c.l.b16 %v563
        %v714 = vunpack.c.h.b16 %v563
        %v715 = vunpack.c.l.b16 %v564
        %v716 = vunpack.c.h.b16 %v564
        %v717 = vunpack.c.l.b16 %v565
        %v718 = vunpack.c.h.b16 %v565
        %v719 = vunpack.c.l.b16 %v566
        %v720 = vunpack.c.h.b16 %v566
        %v721 = vunpack.c.l.b16 %v567
        %v722 = vunpack.c.h.b16 %v567
        %v723 = vunpack.c.l.b16 %v568
        %v724 = vunpack.c.h.b16 %v568
        %v725 = vunpack.c.l.b16 %v569
        %v726 = vunpack.c.h.b16 %v569
        %v727 = vunpack.c.l.b16 %v570
        %v728 = vunpack.c.h.b16 %v570
        %v729 = vunpack.c.l.b16 %v571
        %v730 = vunpack.c.h.b16 %v571
        %v731 = vunpack.c.l.b16 %v572
        %v732 = vunpack.c.h.b16 %v572
        %v733 = vunpack.c.l.b16 %v573
        %v734 = vunpack.c.h.b16 %v573
        %v735 = vunpack.c.l.b16 %v574
        %v736 = vunpack.c.h.b16 %v574
        %v737 = vunpack.c.l.b16 %v575
        %v738 = vunpack.c.h.b16 %v575
        %v739 = vunpack.c.l.b16 %v576
        %v740 = vunpack.c.h.b16 %v576
        %v741 = vunpack.c.l.b16 %v577
        %v742 = vunpack.c.h.b16 %v577
        %v743 = vunpack.c.l.b16 %v578
        %v744 = vunpack.c.h.b16 %v578
        %v745 = vunpack.c.l.b16 %v579
        %v746 = vunpack.c.h.b16 %v579
        %v747 = vunpack.c.l.b16 %v580
        %v748 = vunpack.c.h.b16 %v580
        %v749 = vunpack.c.l.b16 %v581
        %v750 = vunpack.c.h.b16 %v581
        %v751 = vunpack.c.l.b16 %v582
        %v752 = vunpack.c.h.b16 %v582
        %v753 = vunpack.c.l.b16 %v583
        %v754 = vunpack.c.h.b16 %v583
        %v755 = vunpack.c.l.b16 %v584
        %v756 = vunpack.c.h.b16 %v584
        %v757 = vunpack.c.l.b16 %v585
        %v758 = vunpack.c.h.b16 %v585
        %v759 = vunpack.c.l.b16 %v586
        %v760 = vunpack.c.h.b16 %v586
        %v761 = vunpack.c.l.b16 %v587
        %v762 = vunpack.c.h.b16 %v587
        %v763 = vunpack.c.l.b16 %v588
        %v764 = vunpack.c.h.b16 %v588
        %v765 = vunpack.c.l.b16 %v589
        %v766 = vunpack.c.h.b16 %v589
        %v767 = vunpack.c.l.b16 %v590
        %v768 = vunpack.c.h.b16 %v590
        %v769 = vunpack.c.l.b16 %v591
        %v770 = vunpack.c.h.b16 %v591
        %v771 = vunpack.c.l.b16 %v592
        %v772 = vunpack.c.h.b16 %v592
        %v773 = vunpack.c.l.b16 %v593
        %v774 = vunpack.c.h.b16 %v593
        %v775 = vunpack.c.l.b16 %v594
        %v776 = vunpack.c.h.b16 %v594
        %v777 = vunpack.c.l.b16 %v595
        %v778 = vunpack.c.h.b16 %v595
        %v779 = vunpack.c.l.b16 %v596
        %v780 = vunpack.c.h.b16 %v596
        %v781 = vunpack.c.l.b16 %v597
        %v782 = vunpack.c.h.b16 %v597
        %v783 = vunpack.c.l.b16 %v598
        %v784 = vunpack.c.h.b16 %v598
        %v785 = vunpack.c.l.b16 %v599
        %v786 = vunpack.c.h.b16 %v599
        %v787 = vunpack.c.l.b16 %v600
        %v788 = vunpack.c.h.b16 %v600
        %v789 = vunpack.c.l.b16 %v601
        %v790 = vunpack.c.h.b16 %v601
        %v791 = vunpack.c.l.b16 %v602
        %v792 = vunpack.c.h.b16 %v602
        %v793 = vunpack.c.l.b16 %v603
        %v794 = vunpack.c.h.b16 %v603
        %v795 = vunpack.c.l.b16 %v604
        %v796 = vunpack.c.h.b16 %v604
        %v797 = vunpack.c.l.b16 %v605
        %v798 = vunpack.c.h.b16 %v605
        %v799 = vunpack.c.l.b16 %v606
        %v800 = vunpack.c.h.b16 %v606
        %v801 = vunpack.c.l.b16 %v607
        %v802 = vunpack.c.h.b16 %v607
        %v803 = vunpack.c.l.b16 %v608
        %v804 = vunpack.c.h.b16 %v608
        %v805 = vunpack.c.l.b16 %v609
        %v806 = vunpack.c.h.b16 %v609
        %v807 = vunpack.c.l.b16 %v610
        %v808 = vunpack.c.h.b16 %v610
        %v809 = vunpack.c.l.b16 %v611
        %v810 = vunpack.c.h.b16 %v611
        %v811 = vunpack.c.l.b16 %v612
        %v812 = vunpack.c.h.b16 %v612
        %v813 = vunpack.c.l.b16 %v613
        %v814 = vunpack.c.h.b16 %v613
        %v815 = vunpack.c.l.b16 %v614
        %v816 = vunpack.c.h.b16 %v614
        %v817 = vunpack.c.l.b16 %v615
        %v818 = vunpack.c.h.b16 %v615
        %v819 = vunpack.c.l.b16 %v616
        %v820 = vunpack.c.h.b16 %v616
        %v821 = vpack.c.b16 %v695, %v693
        %v822 = vpack.c.b16 %v696, %v694
        %v823 = vpack.c.b16 %v699, %v697
        %v824 = vpack.c.b16 %v700, %v698
        %v825 = vpack.c.b16 %v703, %v701
        %v826 = vpack.c.b16 %v704, %v702
        %v827 = vpack.c.b16 %v707, %v705
        %v828 = vpack.c.b16 %v708, %v706
        %v829 = vpack.c.b16 %v711, %v709
        %v830 = vpack.c.b16 %v712, %v710
        %v831 = vpack.c.b16 %v715, %v713
        %v832 = vpack.c.b16 %v716, %v714
        %v833 = vpack.c.b16 %v719, %v717
        %v834 = vpack.c.b16 %v720, %v718
        %v835 = vpack.c.b16 %v723, %v721
        %v836 = vpack.c.b16 %v724, %v722
        %v837 = vpack.c.b16 %v727, %v725
        %v838 = vpack.c.b16 %v728, %v726
        %v839 = vpack.c.b16 %v731, %v729
        %v840 = vpack.c.b16 %v732, %v730
        %v841 = vpack.c.b16 %v735, %v733
        %v842 = vpack.c.b16 %v736, %v734
        %v843 = vpack.c.b16 %v739, %v737
        %v844 = vpack.c.b16 %v740, %v738
        %v845 = vpack.c.b16 %v743, %v741
        %v846 = vpack.c.b16 %v744, %v742
        %v847 = vpack.c.b16 %v747, %v745
        %v848 = vpack.c.b16 %v748, %v746
        %v849 = vpack.c.b16 %v751, %v749
        %v850 = vpack.c.b16 %v752, %v750
        %v851 = vpack.c.b16 %v755, %v753
        %v852 = vpack.c.b16 %v756, %v754
        %v853 = vpack.c.b16 %v759, %v757
        %v854 = vpack.c.b16 %v760, %v758
        %v855 = vpack.c.b16 %v763, %v761
        %v856 = vpack.c.b16 %v764, %v762
        %v857 = vpack.c.b16 %v767, %v765
        %v858 = vpack.c.b16 %v768, %v766
        %v859 = vpack.c.b16 %v771, %v769
        %v860 = vpack.c.b16 %v772, %v770
        %v861 = vpack.c.b16 %v775, %v773
        %v862 = vpack.c.b16 %v776, %v774
        %v863 = vpack.c.b16 %v779, %v777
        %v864 = vpack.c.b16 %v780, %v778
        %v865 = vpack.c.b16 %v783, %v781
        %v866 = vpack.c.b16 %v784, %v782
        %v867 = vpack.c.b16 %v787, %v785
        %v868 = vpack.c.b16 %v788, %v786
        %v869 = vpack.c.b16 %v791, %v789
        %v870 = vpack.c.b16 %v792, %v790
        %v871 = vpack.c.b16 %v795, %v793
        %v872 = vpack.c.b16 %v796, %v794
        %v873 = vpack.c.b16 %v799, %v797
        %v874 = vpack.c.b16 %v800, %v798
        %v875 = vpack.c.b16 %v803, %v801
        %v876 = vpack.c.b16 %v804, %v802
        %v877 = vpack.c.b16 %v807, %v805
        %v878 = vpack.c.b16 %v808, %v806
        %v879 = vpack.c.b16 %v811, %v809
        %v880 = vpack.c.b16 %v812, %v810
        %v881 = vpack.c.b16 %v815, %v813
        %v882 = vpack.c.b16 %v816, %v814
        %v883 = vpack.c.b16 %v819, %v817
        %v884 = vpack.c.b16 %v820, %v818
        %949 = vmatprep.subr.bf16.mxu0 %v822
        %950 = vmatpush1.bf16.msra.mxu0 %v821
        %951 = vmatprep.subr.bf16.mxu0 %v824
        %952 = vmatpush1.bf16.msra.mxu0 %v823
        %953 = vmatprep.subr.bf16.mxu0 %v826
        %954 = vmatpush1.bf16.msra.mxu0 %v825
        %955 = vmatprep.subr.bf16.mxu0 %v828
        %956 = vmatpush1.bf16.msra.mxu0 %v827
        %957 = vmatprep.subr.bf16.mxu0 %v830
        %958 = vmatpush1.bf16.msra.mxu0 %v829
        %959 = vmatprep.subr.bf16.mxu0 %v832
        %960 = vmatpush1.bf16.msra.mxu0 %v831
        %961 = vmatprep.subr.bf16.mxu0 %v834
        %962 = vmatpush1.bf16.msra.mxu0 %v833
        %963 = vmatprep.subr.bf16.mxu0 %v836
        %964 = vmatpush1.bf16.msra.mxu0 %v835
        %965 = vmatprep.subr.bf16.mxu0 %v838
        %966 = vmatpush1.bf16.msra.mxu0 %v837
        %967 = vmatprep.subr.bf16.mxu0 %v840
        %968 = vmatpush1.bf16.msra.mxu0 %v839
        %969 = vmatprep.subr.bf16.mxu0 %v842
        %970 = vmatpush1.bf16.msra.mxu0 %v841
        %971 = vmatprep.subr.bf16.mxu0 %v844
        %972 = vmatpush1.bf16.msra.mxu0 %v843
        %973 = vmatprep.subr.bf16.mxu0 %v846
        %974 = vmatpush1.bf16.msra.mxu0 %v845
        %975 = vmatprep.subr.bf16.mxu0 %v848
        %976 = vmatpush1.bf16.msra.mxu0 %v847
        %977 = vmatprep.subr.bf16.mxu0 %v850
        %978 = vmatpush1.bf16.msra.mxu0 %v849
        %979 = vmatprep.subr.bf16.mxu0 %v852
        %980 = vmatpush1.bf16.msra.mxu0 %v851
        %981 = vmatprep.mubr.bf16.mxu0 %v490
        %982 = vmatmul.mubr.bf16.gmra.mrb[0].mxu0 %v489
        %v983 = vpop.f32.mrb[0].mxu0
        %v984 = vadd.f32 %v622, %v983
        %v985 = vpop.f32.mrb[0].mxu0
        %v986 = vadd.f32 %v626, %v985
        %v987 = vpop.f32.mrb[0].mxu0
        %v988 = vadd.f32 %v622, %v987
        %v989 = vpop.f32.mrb[0].mxu0
        %v990 = vadd.f32 %v626, %v989
        %991 = vmatprep.mubr.bf16.mxu0 %v494
        %992 = vmatmul.mubr.bf16.gmra.mrb[0].mxu0 %v493
        %v993 = vpop.f32.mrb[0].mxu0
        %v994 = vadd.f32 %v622, %v993
        %v995 = vpop.f32.mrb[0].mxu0
        %v996 = vadd.f32 %v626, %v995
        %v997 = vpop.f32.mrb[0].mxu0
        %v998 = vadd.f32 %v622, %v997
        %v999 = vpop.f32.mrb[0].mxu0
        %v1000 = vadd.f32 %v626, %v999
        %1001 = vmatprep.mubr.bf16.mxu0 %v498
        %1002 = vmatmul.mubr.bf16.gmra.mrb[0].mxu0 %v497
        %v1003 = vpop.f32.mrb[0].mxu0
        %v1004 = vadd.f32 %v622, %v1003
        %v1005 = vpop.f32.mrb[0].mxu0
        %v1006 = vadd.f32 %v626, %v1005
        %v1007 = vpop.f32.mrb[0].mxu0
        %v1008 = vadd.f32 %v622, %v1007
        %v1009 = vpop.f32.mrb[0].mxu0
        %v1010 = vadd.f32 %v626, %v1009
        %1011 = vmatprep.mubr.bf16.mxu0 %v502
        %1012 = vmatmul.mubr.bf16.gmra.mrb[0].mxu0 %v501
        %v1013 = vpop.f32.mrb[0].mxu0
        %v1014 = vadd.f32 %v622, %v1013
        %v1015 = vpop.f32.mrb[0].mxu0
        %v1016 = vadd.f32 %v626, %v1015
        %v1017 = vpop.f32.mrb[0].mxu0
        %v1018 = vadd.f32 %v622, %v1017
        %v1019 = vpop.f32.mrb[0].mxu0
        %v1020 = vadd.f32 %v626, %v1019
        %1021 = vmatprep.mubr.bf16.mxu0 %v506
        %1022 = vmatmul.mubr.bf16.gmra.mrb[0].mxu0 %v505
        %v1023 = vpop.f32.mrb[0].mxu0
        %v1024 = vadd.f32 %v622, %v1023
        %v1025 = vpop.f32.mrb[0].mxu0
        %v1026 = vadd.f32 %v626, %v1025
        %v1027 = vpop.f32.mrb[0].mxu0
        %v1028 = vadd.f32 %v622, %v1027
        %v1029 = vpop.f32.mrb[0].mxu0
        %v1030 = vadd.f32 %v626, %v1029
        %1031 = vmatprep.mubr.bf16.mxu0 %v510
        %1032 = vmatmul.mubr.bf16.gmra.mrb[0].mxu0 %v509
        %v1033 = vpop.f32.mrb[0].mxu0
        %v1034 = vadd.f32 %v622, %v1033
        %v1035 = vpop.f32.mrb[0].mxu0
        %v1036 = vadd.f32 %v626, %v1035
        %v1037 = vpop.f32.mrb[0].mxu0
        %v1038 = vadd.f32 %v622, %v1037
        %v1039 = vpop.f32.mrb[0].mxu0
        %v1040 = vadd.f32 %v626, %v1039
        %1041 = vmatprep.mubr.bf16.mxu0 %v514
        %1042 = vmatmul.mubr.bf16.gmra.mrb[0].mxu0 %v513
        %v1043 = vpop.f32.mrb[0].mxu0
        %v1044 = vadd.f32 %v622, %v1043
        %v1045 = vpop.f32.mrb[0].mxu0
        %v1046 = vadd.f32 %v626, %v1045
        %v1047 = vpop.f32.mrb[0].mxu0
        %v1048 = vadd.f32 %v622, %v1047
        %v1049 = vpop.f32.mrb[0].mxu0
        %v1050 = vadd.f32 %v626, %v1049
        %1051 = vmatprep.mubr.bf16.mxu0 %v518
        %1052 = vmatmul.mubr.bf16.gmra.mrb[0].mxu0 %v517
        %v1053 = vpop.f32.mrb[0].mxu0
        %v1054 = vadd.f32 %v622, %v1053
        %v1055 = vpop.f32.mrb[0].mxu0
        %v1056 = vadd.f32 %v626, %v1055
        %v1057 = vpop.f32.mrb[0].mxu0
        %v1058 = vadd.f32 %v622, %v1057
        %v1059 = vpop.f32.mrb[0].mxu0
        %v1060 = vadd.f32 %v626, %v1059
        %1061 = vmatprep.mubr.bf16.mxu0 %v522
        %1062 = vmatmul.mubr.bf16.gmra.mrb[0].mxu0 %v521
        %v1063 = vpop.f32.mrb[0].mxu0
        %v1064 = vadd.f32 %v622, %v1063
        %v1065 = vpop.f32.mrb[0].mxu0
        %v1066 = vadd.f32 %v626, %v1065
        %v1067 = vpop.f32.mrb[0].mxu0
        %v1068 = vadd.f32 %v622, %v1067
        %v1069 = vpop.f32.mrb[0].mxu0
        %v1070 = vadd.f32 %v626, %v1069
        %1071 = vmatprep.mubr.bf16.mxu0 %v526
        %1072 = vmatmul.mubr.bf16.gmra.mrb[0].mxu0 %v525
        %v1073 = vpop.f32.mrb[0].mxu0
        %v1074 = vadd.f32 %v622, %v1073
        %v1075 = vpop.f32.mrb[0].mxu0
        %v1076 = vadd.f32 %v626, %v1075
        %v1077 = vpop.f32.mrb[0].mxu0
        %v1078 = vadd.f32 %v622, %v1077
        %v1079 = vpop.f32.mrb[0].mxu0
        %v1080 = vadd.f32 %v626, %v1079
        %1081 = vmatprep.mubr.bf16.mxu0 %v530
        %1082 = vmatmul.mubr.bf16.gmra.mrb[0].mxu0 %v529
        %v1083 = vpop.f32.mrb[0].mxu0
        %v1084 = vadd.f32 %v622, %v1083
        %v1085 = vpop.f32.mrb[0].mxu0
        %v1086 = vadd.f32 %v626, %v1085
        %v1087 = vpop.f32.mrb[0].mxu0
        %v1088 = vadd.f32 %v622, %v1087
        %v1089 = vpop.f32.mrb[0].mxu0
        %v1090 = vadd.f32 %v626, %v1089
        %1091 = vmatprep.mubr.bf16.mxu0 %v534
        %1092 = vmatmul.mubr.bf16.gmra.mrb[0].mxu0 %v533
        %v1093 = vpop.f32.mrb[0].mxu0
        %v1094 = vadd.f32 %v622, %v1093
        %v1095 = vpop.f32.mrb[0].mxu0
        %v1096 = vadd.f32 %v626, %v1095
        %v1097 = vpop.f32.mrb[0].mxu0
        %v1098 = vadd.f32 %v622, %v1097
        %v1099 = vpop.f32.mrb[0].mxu0
        %v1100 = vadd.f32 %v626, %v1099
        %1101 = vmatprep.mubr.bf16.mxu0 %v538
        %1102 = vmatmul.mubr.bf16.gmra.mrb[0].mxu0 %v537
        %v1103 = vpop.f32.mrb[0].mxu0
        %v1104 = vadd.f32 %v622, %v1103
        %v1105 = vpop.f32.mrb[0].mxu0
        %v1106 = vadd.f32 %v626, %v1105
        %v1107 = vpop.f32.mrb[0].mxu0
        %v1108 = vadd.f32 %v622, %v1107
        %v1109 = vpop.f32.mrb[0].mxu0
        %v1110 = vadd.f32 %v626, %v1109
        %1111 = vmatprep.mubr.bf16.mxu0 %v542
        %1112 = vmatmul.mubr.bf16.gmra.mrb[0].mxu0 %v541
        %v1113 = vpop.f32.mrb[0].mxu0
        %v1114 = vadd.f32 %v622, %v1113
        %v1115 = vpop.f32.mrb[0].mxu0
        %v1116 = vadd.f32 %v626, %v1115
        %v1117 = vpop.f32.mrb[0].mxu0
        %v1118 = vadd.f32 %v622, %v1117
        %v1119 = vpop.f32.mrb[0].mxu0
        %v1120 = vadd.f32 %v626, %v1119
        %1121 = vmatprep.mubr.bf16.mxu0 %v546
        %1122 = vmatmul.mubr.bf16.gmra.mrb[0].mxu0 %v545
        %v1123 = vpop.f32.mrb[0].mxu0
        %v1124 = vadd.f32 %v622, %v1123
        %v1125 = vpop.f32.mrb[0].mxu0
        %v1126 = vadd.f32 %v626, %v1125
        %v1127 = vpop.f32.mrb[0].mxu0
        %v1128 = vadd.f32 %v622, %v1127
        %v1129 = vpop.f32.mrb[0].mxu0
        %v1130 = vadd.f32 %v626, %v1129
        %1131 = vmatprep.mubr.bf16.mxu0 %v550
        %1132 = vmatmul.mubr.bf16.gmra.mrb[0].mxu0 %v549
        %v1133 = vpop.f32.mrb[0].mxu0
        %v1134 = vadd.f32 %v622, %v1133
        %v1135 = vpop.f32.mrb[0].mxu0
        %v1136 = vadd.f32 %v626, %v1135
        %v1137 = vpop.f32.mrb[0].mxu0
        %v1138 = vadd.f32 %v622, %v1137
        %v1139 = vpop.f32.mrb[0].mxu0
        %v1140 = vadd.f32 %v626, %v1139
        %1141 = vdwg.mxu0
        %1142 = vmatprep.subr.bf16.mxu0 %v854
        %1143 = vmatpush1.bf16.msra.mxu0 %v853
        %1144 = vmatprep.subr.bf16.mxu0 %v856
        %1145 = vmatpush1.bf16.msra.mxu0 %v855
        %1146 = vmatprep.subr.bf16.mxu0 %v858
        %1147 = vmatpush1.bf16.msra.mxu0 %v857
        %1148 = vmatprep.subr.bf16.mxu0 %v860
        %1149 = vmatpush1.bf16.msra.mxu0 %v859
        %1150 = vmatprep.subr.bf16.mxu0 %v862
        %1151 = vmatpush1.bf16.msra.mxu0 %v861
        %1152 = vmatprep.subr.bf16.mxu0 %v864
        %1153 = vmatpush1.bf16.msra.mxu0 %v863
        %1154 = vmatprep.subr.bf16.mxu0 %v866
        %1155 = vmatpush1.bf16.msra.mxu0 %v865
        %1156 = vmatprep.subr.bf16.mxu0 %v868
        %1157 = vmatpush1.bf16.msra.mxu0 %v867
        %1158 = vmatprep.subr.bf16.mxu0 %v870
        %1159 = vmatpush1.bf16.msra.mxu0 %v869
        %1160 = vmatprep.subr.bf16.mxu0 %v872
        %1161 = vmatpush1.bf16.msra.mxu0 %v871
        %1162 = vmatprep.subr.bf16.mxu0 %v874
        %1163 = vmatpush1.bf16.msra.mxu0 %v873
        %1164 = vmatprep.subr.bf16.mxu0 %v876
        %1165 = vmatpush1.bf16.msra.mxu0 %v875
        %1166 = vmatprep.subr.bf16.mxu0 %v878
        %1167 = vmatpush1.bf16.msra.mxu0 %v877
        %1168 = vmatprep.subr.bf16.mxu0 %v880
        %1169 = vmatpush1.bf16.msra.mxu0 %v879
        %1170 = vmatprep.subr.bf16.mxu0 %v882
        %1171 = vmatpush1.bf16.msra.mxu0 %v881
        %1172 = vmatprep.subr.bf16.mxu0 %v884
        %1173 = vmatpush1.bf16.msra.mxu0 %v883
        %1174 = vmatprep.mubr.bf16.mxu0 %v492
        %1175 = vmatmul.mubr.bf16.gmra.mrb[0].mxu0 %v491
        %v1176 = vpop.f32.mrb[0].mxu0
        %v1177 = vadd.f32 %v984, %v1176
        %v1178 = vpop.f32.mrb[0].mxu0
        %v1179 = vadd.f32 %v986, %v1178
        %v1180 = vpop.f32.mrb[0].mxu0
        %v1181 = vadd.f32 %v988, %v1180
        %v1182 = vpop.f32.mrb[0].mxu0
        %v1183 = vadd.f32 %v990, %v1182
        %1184 = vmatprep.mubr.bf16.mxu0 %v496
        %1185 = vmatmul.mubr.bf16.gmra.mrb[0].mxu0 %v495
        %v1186 = vpop.f32.mrb[0].mxu0
        %v1187 = vadd.f32 %v994, %v1186
        %v1188 = vpop.f32.mrb[0].mxu0
        %v1189 = vadd.f32 %v996, %v1188
        %v1190 = vpop.f32.mrb[0].mxu0
        %v1191 = vadd.f32 %v998, %v1190
        %v1192 = vpop.f32.mrb[0].mxu0
        %v1193 = vadd.f32 %v1000, %v1192
        %1194 = vmatprep.mubr.bf16.mxu0 %v500
        %1195 = vmatmul.mubr.bf16.gmra.mrb[0].mxu0 %v499
        %v1196 = vpop.f32.mrb[0].mxu0
        %v1197 = vadd.f32 %v1004, %v1196
        %v1198 = vpop.f32.mrb[0].mxu0
        %v1199 = vadd.f32 %v1006, %v1198
        %v1200 = vpop.f32.mrb[0].mxu0
        %v1201 = vadd.f32 %v1008, %v1200
        %v1202 = vpop.f32.mrb[0].mxu0
        %v1203 = vadd.f32 %v1010, %v1202
        %1204 = vmatprep.mubr.bf16.mxu0 %v504
        %1205 = vmatmul.mubr.bf16.gmra.mrb[0].mxu0 %v503
        %v1206 = vpop.f32.mrb[0].mxu0
        %v1207 = vadd.f32 %v1014, %v1206
        %v1208 = vpop.f32.mrb[0].mxu0
        %v1209 = vadd.f32 %v1016, %v1208
        %v1210 = vpop.f32.mrb[0].mxu0
        %v1211 = vadd.f32 %v1018, %v1210
        %v1212 = vpop.f32.mrb[0].mxu0
        %v1213 = vadd.f32 %v1020, %v1212
        %1214 = vmatprep.mubr.bf16.mxu0 %v508
        %1215 = vmatmul.mubr.bf16.gmra.mrb[0].mxu0 %v507
        %v1216 = vpop.f32.mrb[0].mxu0
        %v1217 = vadd.f32 %v1024, %v1216
        %v1218 = vpop.f32.mrb[0].mxu0
        %v1219 = vadd.f32 %v1026, %v1218
        %v1220 = vpop.f32.mrb[0].mxu0
        %v1221 = vadd.f32 %v1028, %v1220
        %v1222 = vpop.f32.mrb[0].mxu0
        %v1223 = vadd.f32 %v1030, %v1222
        %1224 = vmatprep.mubr.bf16.mxu0 %v512
        %1225 = vmatmul.mubr.bf16.gmra.mrb[0].mxu0 %v511
        %v1226 = vpop.f32.mrb[0].mxu0
        %v1227 = vadd.f32 %v1034, %v1226
        %v1228 = vpop.f32.mrb[0].mxu0
        %v1229 = vadd.f32 %v1036, %v1228
        %v1230 = vpop.f32.mrb[0].mxu0
        %v1231 = vadd.f32 %v1038, %v1230
        %v1232 = vpop.f32.mrb[0].mxu0
        %v1233 = vadd.f32 %v1040, %v1232
        %1234 = vmatprep.mubr.bf16.mxu0 %v516
        %1235 = vmatmul.mubr.bf16.gmra.mrb[0].mxu0 %v515
        %v1236 = vpop.f32.mrb[0].mxu0
        %v1237 = vadd.f32 %v1044, %v1236
        %v1238 = vpop.f32.mrb[0].mxu0
        %v1239 = vadd.f32 %v1046, %v1238
        %v1240 = vpop.f32.mrb[0].mxu0
        %v1241 = vadd.f32 %v1048, %v1240
        %v1242 = vpop.f32.mrb[0].mxu0
        %v1243 = vadd.f32 %v1050, %v1242
        %1244 = vmatprep.mubr.bf16.mxu0 %v520
        %1245 = vmatmul.mubr.bf16.gmra.mrb[0].mxu0 %v519
        %v1246 = vpop.f32.mrb[0].mxu0
        %v1247 = vadd.f32 %v1054, %v1246
        %v1248 = vpop.f32.mrb[0].mxu0
        %v1249 = vadd.f32 %v1056, %v1248
        %v1250 = vpop.f32.mrb[0].mxu0
        %v1251 = vadd.f32 %v1058, %v1250
        %v1252 = vpop.f32.mrb[0].mxu0
        %v1253 = vadd.f32 %v1060, %v1252
        %1254 = vmatprep.mubr.bf16.mxu0 %v524
        %1255 = vmatmul.mubr.bf16.gmra.mrb[0].mxu0 %v523
        %v1256 = vpop.f32.mrb[0].mxu0
        %v1257 = vadd.f32 %v1064, %v1256
        %v1258 = vpop.f32.mrb[0].mxu0
        %v1259 = vadd.f32 %v1066, %v1258
        %v1260 = vpop.f32.mrb[0].mxu0
        %v1261 = vadd.f32 %v1068, %v1260
        %v1262 = vpop.f32.mrb[0].mxu0
        %v1263 = vadd.f32 %v1070, %v1262
        %1264 = vmatprep.mubr.bf16.mxu0 %v528
        %1265 = vmatmul.mubr.bf16.gmra.mrb[0].mxu0 %v527
        %v1266 = vpop.f32.mrb[0].mxu0
        %v1267 = vadd.f32 %v1074, %v1266
        %v1268 = vpop.f32.mrb[0].mxu0
        %v1269 = vadd.f32 %v1076, %v1268
        %v1270 = vpop.f32.mrb[0].mxu0
        %v1271 = vadd.f32 %v1078, %v1270
        %v1272 = vpop.f32.mrb[0].mxu0
        %v1273 = vadd.f32 %v1080, %v1272
        %1274 = vmatprep.mubr.bf16.mxu0 %v532
        %1275 = vmatmul.mubr.bf16.gmra.mrb[0].mxu0 %v531
        %v1276 = vpop.f32.mrb[0].mxu0
        %v1277 = vadd.f32 %v1084, %v1276
        %v1278 = vpop.f32.mrb[0].mxu0
        %v1279 = vadd.f32 %v1086, %v1278
        %v1280 = vpop.f32.mrb[0].mxu0
        %v1281 = vadd.f32 %v1088, %v1280
        %v1282 = vpop.f32.mrb[0].mxu0
        %v1283 = vadd.f32 %v1090, %v1282
        %1284 = vmatprep.mubr.bf16.mxu0 %v536
        %1285 = vmatmul.mubr.bf16.gmra.mrb[0].mxu0 %v535
        %v1286 = vpop.f32.mrb[0].mxu0
        %v1287 = vadd.f32 %v1094, %v1286
        %v1288 = vpop.f32.mrb[0].mxu0
        %v1289 = vadd.f32 %v1096, %v1288
        %v1290 = vpop.f32.mrb[0].mxu0
        %v1291 = vadd.f32 %v1098, %v1290
        %v1292 = vpop.f32.mrb[0].mxu0
        %v1293 = vadd.f32 %v1100, %v1292
        %1294 = vmatprep.mubr.bf16.mxu0 %v540
        %1295 = vmatmul.mubr.bf16.gmra.mrb[0].mxu0 %v539
        %v1296 = vpop.f32.mrb[0].mxu0
        %v1297 = vadd.f32 %v1104, %v1296
        %v1298 = vpop.f32.mrb[0].mxu0
        %v1299 = vadd.f32 %v1106, %v1298
        %v1300 = vpop.f32.mrb[0].mxu0
        %v1301 = vadd.f32 %v1108, %v1300
        %v1302 = vpop.f32.mrb[0].mxu0
        %v1303 = vadd.f32 %v1110, %v1302
        %1304 = vmatprep.mubr.bf16.mxu0 %v544
        %1305 = vmatmul.mubr.bf16.gmra.mrb[0].mxu0 %v543
        %v1306 = vpop.f32.mrb[0].mxu0
        %v1307 = vadd.f32 %v1114, %v1306
        %v1308 = vpop.f32.mrb[0].mxu0
        %v1309 = vadd.f32 %v1116, %v1308
        %v1310 = vpop.f32.mrb[0].mxu0
        %v1311 = vadd.f32 %v1118, %v1310
        %v1312 = vpop.f32.mrb[0].mxu0
        %v1313 = vadd.f32 %v1120, %v1312
        %1314 = vmatprep.mubr.bf16.mxu0 %v548
        %1315 = vmatmul.mubr.bf16.gmra.mrb[0].mxu0 %v547
        %v1316 = vpop.f32.mrb[0].mxu0
        %v1317 = vadd.f32 %v1124, %v1316
        %v1318 = vpop.f32.mrb[0].mxu0
        %v1319 = vadd.f32 %v1126, %v1318
        %v1320 = vpop.f32.mrb[0].mxu0
        %v1321 = vadd.f32 %v1128, %v1320
        %v1322 = vpop.f32.mrb[0].mxu0
        %v1323 = vadd.f32 %v1130, %v1322
        %1324 = vmatprep.mubr.bf16.mxu0 %v552
        %1325 = vmatmul.mubr.bf16.gmra.mrb[0].mxu0 %v551
        %v1326 = vpop.f32.mrb[0].mxu0
        %v1327 = vadd.f32 %v1134, %v1326
        %v1328 = vpop.f32.mrb[0].mxu0
        %v1329 = vadd.f32 %v1136, %v1328
        %v1330 = vpop.f32.mrb[0].mxu0
        %v1331 = vadd.f32 %v1138, %v1330
        %v1332 = vpop.f32.mrb[0].mxu0
        %v1333 = vadd.f32 %v1140, %v1332
        %1334 = vdwg.mxu0
        %v1335 = vmax.f32 %v1177, 0.0
        %v1336 = vmax.f32 %v1179, 0.0
        %v1337 = vmax.f32 %v1181, 0.0
        %v1338 = vmax.f32 %v1183, 0.0
        %v1339 = vmax.f32 %v1187, 0.0
        %v1340 = vmax.f32 %v1189, 0.0
        %v1341 = vmax.f32 %v1191, 0.0
        %v1342 = vmax.f32 %v1193, 0.0
        %v1343 = vmax.f32 %v1197, 0.0
        %v1344 = vmax.f32 %v1199, 0.0
        %v1345 = vmax.f32 %v1201, 0.0
        %v1346 = vmax.f32 %v1203, 0.0
        %v1347 = vmax.f32 %v1207, 0.0
        %v1348 = vmax.f32 %v1209, 0.0
        %v1349 = vmax.f32 %v1211, 0.0
        %v1350 = vmax.f32 %v1213, 0.0
        %v1351 = vmax.f32 %v1217, 0.0
        %v1352 = vmax.f32 %v1219, 0.0
        %v1353 = vmax.f32 %v1221, 0.0
        %v1354 = vmax.f32 %v1223, 0.0
        %v1355 = vmax.f32 %v1227, 0.0
        %v1356 = vmax.f32 %v1229, 0.0
        %v1357 = vmax.f32 %v1231, 0.0
        %v1358 = vmax.f32 %v1233, 0.0
        %v1359 = vmax.f32 %v1237, 0.0
        %v1360 = vmax.f32 %v1239, 0.0
        %v1361 = vmax.f32 %v1241, 0.0
        %v1362 = vmax.f32 %v1243, 0.0
        %v1363 = vmax.f32 %v1247, 0.0
        %v1364 = vmax.f32 %v1249, 0.0
        %v1365 = vmax.f32 %v1251, 0.0
        %v1366 = vmax.f32 %v1253, 0.0
        %v1367 = vmax.f32 %v1257, 0.0
        %v1368 = vmax.f32 %v1259, 0.0
        %v1369 = vmax.f32 %v1261, 0.0
        %v1370 = vmax.f32 %v1263, 0.0
        %v1371 = vmax.f32 %v1267, 0.0
        %v1372 = vmax.f32 %v1269, 0.0
        %v1373 = vmax.f32 %v1271, 0.0
        %v1374 = vmax.f32 %v1273, 0.0
        %v1375 = vmax.f32 %v1277, 0.0
        %v1376 = vmax.f32 %v1279, 0.0
        %v1377 = vmax.f32 %v1281, 0.0
        %v1378 = vmax.f32 %v1283, 0.0
        %v1379 = vmax.f32 %v1287, 0.0
        %v1380 = vmax.f32 %v1289, 0.0
        %v1381 = vmax.f32 %v1291, 0.0
        %v1382 = vmax.f32 %v1293, 0.0
        %v1383 = vmax.f32 %v1297, 0.0
        %v1384 = vmax.f32 %v1299, 0.0
        %v1385 = vmax.f32 %v1301, 0.0
        %v1386 = vmax.f32 %v1303, 0.0
        %v1387 = vmax.f32 %v1307, 0.0
        %v1388 = vmax.f32 %v1309, 0.0
        %v1389 = vmax.f32 %v1311, 0.0
        %v1390 = vmax.f32 %v1313, 0.0
        %v1391 = vmax.f32 %v1317, 0.0
        %v1392 = vmax.f32 %v1319, 0.0
        %v1393 = vmax.f32 %v1321, 0.0
        %v1394 = vmax.f32 %v1323, 0.0
        %v1395 = vmax.f32 %v1327, 0.0
        %v1396 = vmax.f32 %v1329, 0.0
        %v1397 = vmax.f32 %v1331, 0.0
        %v1398 = vmax.f32 %v1333, 0.0
        %v1399 = vpack.c.bf16 %v1337, %v1335
        %v1400 = vpack.c.bf16 %v1338, %v1336
        %v1401 = vpack.c.bf16 %v1341, %v1339
        %v1402 = vpack.c.bf16 %v1342, %v1340
        %v1403 = vpack.c.bf16 %v1345, %v1343
        %v1404 = vpack.c.bf16 %v1346, %v1344
        %v1405 = vpack.c.bf16 %v1349, %v1347
        %v1406 = vpack.c.bf16 %v1350, %v1348
        %v1407 = vpack.c.bf16 %v1353, %v1351
        %v1408 = vpack.c.bf16 %v1354, %v1352
        %v1409 = vpack.c.bf16 %v1357, %v1355
        %v1410 = vpack.c.bf16 %v1358, %v1356
        %v1411 = vpack.c.bf16 %v1361, %v1359
        %v1412 = vpack.c.bf16 %v1362, %v1360
        %v1413 = vpack.c.bf16 %v1365, %v1363
        %v1414 = vpack.c.bf16 %v1366, %v1364
        %v1415 = vpack.c.bf16 %v1369, %v1367
        %v1416 = vpack.c.bf16 %v1370, %v1368
        %v1417 = vpack.c.bf16 %v1373, %v1371
        %v1418 = vpack.c.bf16 %v1374, %v1372
        %v1419 = vpack.c.bf16 %v1377, %v1375
        %v1420 = vpack.c.bf16 %v1378, %v1376
        %v1421 = vpack.c.bf16 %v1381, %v1379
        %v1422 = vpack.c.bf16 %v1382, %v1380
        %v1423 = vpack.c.bf16 %v1385, %v1383
        %v1424 = vpack.c.bf16 %v1386, %v1384
        %v1425 = vpack.c.bf16 %v1389, %v1387
        %v1426 = vpack.c.bf16 %v1390, %v1388
        %v1427 = vpack.c.bf16 %v1393, %v1391
        %v1428 = vpack.c.bf16 %v1394, %v1392
        %v1429 = vpack.c.bf16 %v1397, %v1395
        %v1430 = vpack.c.bf16 %v1398, %v1396
        %v1431 = vld [vmem:[#allocation7] sm:$0xf]
        %v1432 = vld [vmem:[#allocation7 + $0x4] sm:$0xf]
        %v1433 = vld [vmem:[#allocation7 + $0x8] sm:$0xf]
        %v1434 = vld [vmem:[#allocation7 + $0xc] sm:$0xf]
        %v1435 = vld [vmem:[#allocation7 + $0x10] sm:$0xf]
        %v1436 = vld [vmem:[#allocation7 + $0x14] sm:$0xf]
        %v1437 = vld [vmem:[#allocation7 + $0x18] sm:$0xf]
        %v1438 = vld [vmem:[#allocation7 + $0x1c] sm:$0xf]
        %v1439 = vld [vmem:[#allocation7 + $0x20] sm:$0xf]
        %v1440 = vld [vmem:[#allocation7 + $0x24] sm:$0xf]
        %v1441 = vld [vmem:[#allocation7 + $0x28] sm:$0xf]
        %v1442 = vld [vmem:[#allocation7 + $0x2c] sm:$0xf]
        %v1443 = vld [vmem:[#allocation7 + $0x30] sm:$0xf]
        %v1444 = vld [vmem:[#allocation7 + $0x34] sm:$0xf]
        %v1445 = vld [vmem:[#allocation7 + $0x38] sm:$0xf]
        %v1446 = vld [vmem:[#allocation7 + $0x3c] sm:$0xf]
        %v1447 = vld [vmem:[#allocation7 + $0x40] sm:$0xf]
        %v1448 = vld [vmem:[#allocation7 + $0x44] sm:$0xf]
        %v1449 = vld [vmem:[#allocation7 + $0x48] sm:$0xf]
        %v1450 = vld [vmem:[#allocation7 + $0x4c] sm:$0xf]
        %v1451 = vld [vmem:[#allocation7 + $0x50] sm:$0xf]
        %v1452 = vld [vmem:[#allocation7 + $0x54] sm:$0xf]
        %v1453 = vld [vmem:[#allocation7 + $0x58] sm:$0xf]
        %v1454 = vld [vmem:[#allocation7 + $0x5c] sm:$0xf]
        %v1455 = vld [vmem:[#allocation7 + $0x60] sm:$0xf]
        %v1456 = vld [vmem:[#allocation7 + $0x64] sm:$0xf]
        %v1457 = vld [vmem:[#allocation7 + $0x68] sm:$0xf]
        %v1458 = vld [vmem:[#allocation7 + $0x6c] sm:$0xf]
        %v1459 = vld [vmem:[#allocation7 + $0x70] sm:$0xf]
        %v1460 = vld [vmem:[#allocation7 + $0x74] sm:$0xf]
        %v1461 = vld [vmem:[#allocation7 + $0x78] sm:$0xf]
        %v1462 = vld [vmem:[#allocation7 + $0x7c] sm:$0xf]
        %v1463 = vld [vmem:[%s4] sm:$0x1]
        %v1465 = vlaneseq
        %v1466 = vshrl.u32 %v1465, 7
        %v1467 = vsub.s32 0, %v1466
        %v1468 = vrot.slane %v1463, %v1467
        %v1502 = vunpack.c.l.b16 %v1431
        %v1503 = vunpack.c.l.b16 %v1432
        %v1504 = vunpack.c.l.b16 %v1433
        %v1505 = vunpack.c.l.b16 %v1434
        %v1506 = vunpack.c.l.b16 %v1435
        %v1507 = vunpack.c.l.b16 %v1436
        %v1508 = vunpack.c.l.b16 %v1437
        %v1509 = vunpack.c.l.b16 %v1438
        %v1510 = vunpack.c.l.b16 %v1439
        %v1511 = vunpack.c.l.b16 %v1440
        %v1512 = vunpack.c.l.b16 %v1441
        %v1513 = vunpack.c.l.b16 %v1442
        %v1514 = vunpack.c.l.b16 %v1443
        %v1515 = vunpack.c.l.b16 %v1444
        %v1516 = vunpack.c.l.b16 %v1445
        %v1517 = vunpack.c.l.b16 %v1446
        %v1518 = vunpack.c.l.b16 %v1447
        %v1519 = vunpack.c.l.b16 %v1448
        %v1520 = vunpack.c.l.b16 %v1449
        %v1521 = vunpack.c.l.b16 %v1450
        %v1522 = vunpack.c.l.b16 %v1451
        %v1523 = vunpack.c.l.b16 %v1452
        %v1524 = vunpack.c.l.b16 %v1453
        %v1525 = vunpack.c.l.b16 %v1454
        %v1526 = vunpack.c.l.b16 %v1455
        %v1527 = vunpack.c.l.b16 %v1456
        %v1528 = vunpack.c.l.b16 %v1457
        %v1529 = vunpack.c.l.b16 %v1458
        %v1530 = vunpack.c.l.b16 %v1459
        %v1531 = vunpack.c.l.b16 %v1460
        %v1532 = vunpack.c.l.b16 %v1461
        %v1533 = vunpack.c.l.b16 %v1462
        %v1534 = vpack.c.b16 %v1503, %v1502
        %v1535 = vpack.c.b16 %v1505, %v1504
        %v1536 = vpack.c.b16 %v1507, %v1506
        %v1537 = vpack.c.b16 %v1509, %v1508
        %v1538 = vpack.c.b16 %v1511, %v1510
        %v1539 = vpack.c.b16 %v1513, %v1512
        %v1540 = vpack.c.b16 %v1515, %v1514
        %v1541 = vpack.c.b16 %v1517, %v1516
        %v1542 = vpack.c.b16 %v1519, %v1518
        %v1543 = vpack.c.b16 %v1521, %v1520
        %v1544 = vpack.c.b16 %v1523, %v1522
        %v1545 = vpack.c.b16 %v1525, %v1524
        %v1546 = vpack.c.b16 %v1527, %v1526
        %v1547 = vpack.c.b16 %v1529, %v1528
        %v1548 = vpack.c.b16 %v1531, %v1530
        %v1549 = vpack.c.b16 %v1533, %v1532
        %1566 = vmatprep.subr.bf16.mxu0 0
        %1567 = vmatpush1.bf16.msra.mxu0 %v1534
        %1568 = vmatprep.subr.bf16.mxu0 0
        %1569 = vmatpush1.bf16.msra.mxu0 %v1535
        %1570 = vmatprep.subr.bf16.mxu0 0
        %1571 = vmatpush1.bf16.msra.mxu0 %v1536
        %1572 = vmatprep.subr.bf16.mxu0 0
        %1573 = vmatpush1.bf16.msra.mxu0 %v1537
        %1574 = vmatprep.subr.bf16.mxu0 0
        %1575 = vmatpush1.bf16.msra.mxu0 %v1538
        %1576 = vmatprep.subr.bf16.mxu0 0
        %1577 = vmatpush1.bf16.msra.mxu0 %v1539
        %1578 = vmatprep.subr.bf16.mxu0 0
        %1579 = vmatpush1.bf16.msra.mxu0 %v1540
        %1580 = vmatprep.subr.bf16.mxu0 0
        %1581 = vmatpush1.bf16.msra.mxu0 %v1541
        %1582 = vmatprep.subr.bf16.mxu0 0
        %1583 = vmatpush1.bf16.msra.mxu0 %v1542
        %1584 = vmatprep.subr.bf16.mxu0 0
        %1585 = vmatpush1.bf16.msra.mxu0 %v1543
        %1586 = vmatprep.subr.bf16.mxu0 0
        %1587 = vmatpush1.bf16.msra.mxu0 %v1544
        %1588 = vmatprep.subr.bf16.mxu0 0
        %1589 = vmatpush1.bf16.msra.mxu0 %v1545
        %1590 = vmatprep.subr.bf16.mxu0 0
        %1591 = vmatpush1.bf16.msra.mxu0 %v1546
        %1592 = vmatprep.subr.bf16.mxu0 0
        %1593 = vmatpush1.bf16.msra.mxu0 %v1547
        %1594 = vmatprep.subr.bf16.mxu0 0
        %1595 = vmatpush1.bf16.msra.mxu0 %v1548
        %1596 = vmatprep.subr.bf16.mxu0 0
        %1597 = vmatpush1.bf16.msra.mxu0 %v1549
        %1598 = vmatprep.mubr.bf16.mxu0 %v1400
        %1599 = vmatmul.mubr.bf16.gmra.mrb[0].mxu0 %v1399
        %v1600 = vpop.f32.mrb[0].mxu0
        %v1601 = vadd.f32 %v1468, %v1600
        %v1602 = vpop.f32.mrb[0].mxu0
        %v1603 = vpop.f32.mrb[0].mxu0
        %v1604 = vadd.f32 %v1468, %v1603
        %v1605 = vpop.f32.mrb[0].mxu0
        %1606 = vmatprep.mubr.bf16.mxu0 %v1402
        %1607 = vmatmul.mubr.bf16.gmra.mrb[0].mxu0 %v1401
        %v1608 = vpop.f32.mrb[0].mxu0
        %v1609 = vadd.f32 %v1468, %v1608
        %v1610 = vpop.f32.mrb[0].mxu0
        %v1611 = vpop.f32.mrb[0].mxu0
        %v1612 = vadd.f32 %v1468, %v1611
        %v1613 = vpop.f32.mrb[0].mxu0
        %1614 = vmatprep.mubr.bf16.mxu0 %v1404
        %1615 = vmatmul.mubr.bf16.gmra.mrb[0].mxu0 %v1403
        %v1616 = vpop.f32.mrb[0].mxu0
        %v1617 = vadd.f32 %v1468, %v1616
        %v1618 = vpop.f32.mrb[0].mxu0
        %v1619 = vpop.f32.mrb[0].mxu0
        %v1620 = vadd.f32 %v1468, %v1619
        %v1621 = vpop.f32.mrb[0].mxu0
        %1622 = vmatprep.mubr.bf16.mxu0 %v1406
        %1623 = vmatmul.mubr.bf16.gmra.mrb[0].mxu0 %v1405
        %v1624 = vpop.f32.mrb[0].mxu0
        %v1625 = vadd.f32 %v1468, %v1624
        %v1626 = vpop.f32.mrb[0].mxu0
        %v1627 = vpop.f32.mrb[0].mxu0
        %v1628 = vadd.f32 %v1468, %v1627
        %v1629 = vpop.f32.mrb[0].mxu0
        %1630 = vmatprep.mubr.bf16.mxu0 %v1408
        %1631 = vmatmul.mubr.bf16.gmra.mrb[0].mxu0 %v1407
        %v1632 = vpop.f32.mrb[0].mxu0
        %v1633 = vadd.f32 %v1468, %v1632
        %v1634 = vpop.f32.mrb[0].mxu0
        %v1635 = vpop.f32.mrb[0].mxu0
        %v1636 = vadd.f32 %v1468, %v1635
        %v1637 = vpop.f32.mrb[0].mxu0
        %1638 = vmatprep.mubr.bf16.mxu0 %v1410
        %1639 = vmatmul.mubr.bf16.gmra.mrb[0].mxu0 %v1409
        %v1640 = vpop.f32.mrb[0].mxu0
        %v1641 = vadd.f32 %v1468, %v1640
        %v1642 = vpop.f32.mrb[0].mxu0
        %v1643 = vpop.f32.mrb[0].mxu0
        %v1644 = vadd.f32 %v1468, %v1643
        %v1645 = vpop.f32.mrb[0].mxu0
        %1646 = vmatprep.mubr.bf16.mxu0 %v1412
        %1647 = vmatmul.mubr.bf16.gmra.mrb[0].mxu0 %v1411
        %v1648 = vpop.f32.mrb[0].mxu0
        %v1649 = vadd.f32 %v1468, %v1648
        %v1650 = vpop.f32.mrb[0].mxu0
        %v1651 = vpop.f32.mrb[0].mxu0
        %v1652 = vadd.f32 %v1468, %v1651
        %v1653 = vpop.f32.mrb[0].mxu0
        %1654 = vmatprep.mubr.bf16.mxu0 %v1414
        %1655 = vmatmul.mubr.bf16.gmra.mrb[0].mxu0 %v1413
        %v1656 = vpop.f32.mrb[0].mxu0
        %v1657 = vadd.f32 %v1468, %v1656
        %v1658 = vpop.f32.mrb[0].mxu0
        %v1659 = vpop.f32.mrb[0].mxu0
        %v1660 = vadd.f32 %v1468, %v1659
        %v1661 = vpop.f32.mrb[0].mxu0
        %1662 = vmatprep.mubr.bf16.mxu0 %v1416
        %1663 = vmatmul.mubr.bf16.gmra.mrb[0].mxu0 %v1415
        %v1664 = vpop.f32.mrb[0].mxu0
        %v1665 = vadd.f32 %v1468, %v1664
        %v1666 = vpop.f32.mrb[0].mxu0
        %v1667 = vpop.f32.mrb[0].mxu0
        %v1668 = vadd.f32 %v1468, %v1667
        %v1669 = vpop.f32.mrb[0].mxu0
        %1670 = vmatprep.mubr.bf16.mxu0 %v1418
        %1671 = vmatmul.mubr.bf16.gmra.mrb[0].mxu0 %v1417
        %v1672 = vpop.f32.mrb[0].mxu0
        %v1673 = vadd.f32 %v1468, %v1672
        %v1674 = vpop.f32.mrb[0].mxu0
        %v1675 = vpop.f32.mrb[0].mxu0
        %v1676 = vadd.f32 %v1468, %v1675
        %v1677 = vpop.f32.mrb[0].mxu0
        %1678 = vmatprep.mubr.bf16.mxu0 %v1420
        %1679 = vmatmul.mubr.bf16.gmra.mrb[0].mxu0 %v1419
        %v1680 = vpop.f32.mrb[0].mxu0
        %v1681 = vadd.f32 %v1468, %v1680
        %v1682 = vpop.f32.mrb[0].mxu0
        %v1683 = vpop.f32.mrb[0].mxu0
        %v1684 = vadd.f32 %v1468, %v1683
        %v1685 = vpop.f32.mrb[0].mxu0
        %1686 = vmatprep.mubr.bf16.mxu0 %v1422
        %1687 = vmatmul.mubr.bf16.gmra.mrb[0].mxu0 %v1421
        %v1688 = vpop.f32.mrb[0].mxu0
        %v1689 = vadd.f32 %v1468, %v1688
        %v1690 = vpop.f32.mrb[0].mxu0
        %v1691 = vpop.f32.mrb[0].mxu0
        %v1692 = vadd.f32 %v1468, %v1691
        %v1693 = vpop.f32.mrb[0].mxu0
        %1694 = vmatprep.mubr.bf16.mxu0 %v1424
        %1695 = vmatmul.mubr.bf16.gmra.mrb[0].mxu0 %v1423
        %v1696 = vpop.f32.mrb[0].mxu0
        %v1697 = vadd.f32 %v1468, %v1696
        %v1698 = vpop.f32.mrb[0].mxu0
        %v1699 = vpop.f32.mrb[0].mxu0
        %v1700 = vadd.f32 %v1468, %v1699
        %v1701 = vpop.f32.mrb[0].mxu0
        %1702 = vmatprep.mubr.bf16.mxu0 %v1426
        %1703 = vmatmul.mubr.bf16.gmra.mrb[0].mxu0 %v1425
        %v1704 = vpop.f32.mrb[0].mxu0
        %v1705 = vadd.f32 %v1468, %v1704
        %v1706 = vpop.f32.mrb[0].mxu0
        %v1707 = vpop.f32.mrb[0].mxu0
        %v1708 = vadd.f32 %v1468, %v1707
        %v1709 = vpop.f32.mrb[0].mxu0
        %1710 = vmatprep.mubr.bf16.mxu0 %v1428
        %1711 = vmatmul.mubr.bf16.gmra.mrb[0].mxu0 %v1427
        %v1712 = vpop.f32.mrb[0].mxu0
        %v1713 = vadd.f32 %v1468, %v1712
        %v1714 = vpop.f32.mrb[0].mxu0
        %v1715 = vpop.f32.mrb[0].mxu0
        %v1716 = vadd.f32 %v1468, %v1715
        %v1717 = vpop.f32.mrb[0].mxu0
        %1718 = vmatprep.mubr.bf16.mxu0 %v1430
        %1719 = vmatmul.mubr.bf16.gmra.mrb[0].mxu0 %v1429
        %v1720 = vpop.f32.mrb[0].mxu0
        %v1721 = vadd.f32 %v1468, %v1720
        %v1722 = vpop.f32.mrb[0].mxu0
        %v1723 = vpop.f32.mrb[0].mxu0
        %v1724 = vadd.f32 %v1468, %v1723
        %v1725 = vpop.f32.mrb[0].mxu0
        %1726 = vdwg.mxu0
        %v1727 = vmax.f32 %v1601, 0.0
        %v1728 = vmax.f32 %v1604, 0.0
        %v1729 = vmax.f32 %v1609, 0.0
        %v1730 = vmax.f32 %v1612, 0.0
        %v1731 = vmax.f32 %v1617, 0.0
        %v1732 = vmax.f32 %v1620, 0.0
        %v1733 = vmax.f32 %v1625, 0.0
        %v1734 = vmax.f32 %v1628, 0.0
        %v1735 = vmax.f32 %v1633, 0.0
        %v1736 = vmax.f32 %v1636, 0.0
        %v1737 = vmax.f32 %v1641, 0.0
        %v1738 = vmax.f32 %v1644, 0.0
        %v1739 = vmax.f32 %v1649, 0.0
        %v1740 = vmax.f32 %v1652, 0.0
        %v1741 = vmax.f32 %v1657, 0.0
        %v1742 = vmax.f32 %v1660, 0.0
        %v1743 = vmax.f32 %v1665, 0.0
        %v1744 = vmax.f32 %v1668, 0.0
        %v1745 = vmax.f32 %v1673, 0.0
        %v1746 = vmax.f32 %v1676, 0.0
        %v1747 = vmax.f32 %v1681, 0.0
        %v1748 = vmax.f32 %v1684, 0.0
        %v1749 = vmax.f32 %v1689, 0.0
        %v1750 = vmax.f32 %v1692, 0.0
        %v1751 = vmax.f32 %v1697, 0.0
        %v1752 = vmax.f32 %v1700, 0.0
        %v1753 = vmax.f32 %v1705, 0.0
        %v1754 = vmax.f32 %v1708, 0.0
        %v1755 = vmax.f32 %v1713, 0.0
        %v1756 = vmax.f32 %v1716, 0.0
        %v1757 = vmax.f32 %v1721, 0.0
        %v1758 = vmax.f32 %v1724, 0.0
        %v1759 = vpack.c.bf16 %v1728, %v1727
        %v1760 = vpack.c.bf16 %v1730, %v1729
        %v1761 = vpack.c.bf16 %v1732, %v1731
        %v1762 = vpack.c.bf16 %v1734, %v1733
        %v1763 = vpack.c.bf16 %v1736, %v1735
        %v1764 = vpack.c.bf16 %v1738, %v1737
        %v1765 = vpack.c.bf16 %v1740, %v1739
        %v1766 = vpack.c.bf16 %v1742, %v1741
        %v1767 = vpack.c.bf16 %v1744, %v1743
        %v1768 = vpack.c.bf16 %v1746, %v1745
        %v1769 = vpack.c.bf16 %v1748, %v1747
        %v1770 = vpack.c.bf16 %v1750, %v1749
        %v1771 = vpack.c.bf16 %v1752, %v1751
        %v1772 = vpack.c.bf16 %v1754, %v1753
        %v1773 = vpack.c.bf16 %v1756, %v1755
        %v1774 = vpack.c.bf16 %v1758, %v1757
        %v1775 = vld [vmem:[#allocation8] sm:$0xf]
        %v1776 = vld [vmem:[#allocation8 + $0x4] sm:$0xf]
        %v1777 = vld [vmem:[#allocation8 + $0x8] sm:$0xf]
        %v1778 = vld [vmem:[#allocation8 + $0xc] sm:$0xf]
        %v1779 = vld [vmem:[#allocation8 + $0x10] sm:$0xf]
        %v1780 = vld [vmem:[#allocation8 + $0x14] sm:$0xf]
        %v1781 = vld [vmem:[#allocation8 + $0x18] sm:$0xf]
        %v1782 = vld [vmem:[#allocation8 + $0x1c] sm:$0xf]
        %v1783 = vld [vmem:[#allocation8 + $0x20] sm:$0xf]
        %v1784 = vld [vmem:[#allocation8 + $0x24] sm:$0xf]
        %v1785 = vld [vmem:[#allocation8 + $0x28] sm:$0xf]
        %v1786 = vld [vmem:[#allocation8 + $0x2c] sm:$0xf]
        %v1787 = vld [vmem:[#allocation8 + $0x30] sm:$0xf]
        %v1788 = vld [vmem:[#allocation8 + $0x34] sm:$0xf]
        %v1789 = vld [vmem:[#allocation8 + $0x38] sm:$0xf]
        %v1790 = vld [vmem:[#allocation8 + $0x3c] sm:$0xf]
        %v1791 = vld [vmem:[%s6] sm:$0x1]
        %v1793 = vlaneseq
        %v1794 = vshrl.u32 %v1793, 7
        %v1795 = vsub.s32 0, %v1794
        %v1796 = vrot.slane %v1791, %v1795
        %v1814 = vunpack.c.l.b16 %v1775
        %v1815 = vunpack.c.l.b16 %v1776
        %v1816 = vunpack.c.l.b16 %v1777
        %v1817 = vunpack.c.l.b16 %v1778
        %v1818 = vunpack.c.l.b16 %v1779
        %v1819 = vunpack.c.l.b16 %v1780
        %v1820 = vunpack.c.l.b16 %v1781
        %v1821 = vunpack.c.l.b16 %v1782
        %v1822 = vunpack.c.l.b16 %v1783
        %v1823 = vunpack.c.l.b16 %v1784
        %v1824 = vunpack.c.l.b16 %v1785
        %v1825 = vunpack.c.l.b16 %v1786
        %v1826 = vunpack.c.l.b16 %v1787
        %v1827 = vunpack.c.l.b16 %v1788
        %v1828 = vunpack.c.l.b16 %v1789
        %v1829 = vunpack.c.l.b16 %v1790
        %v1830 = vpack.c.b16 %v1815, %v1814
        %v1831 = vpack.c.b16 %v1817, %v1816
        %v1832 = vpack.c.b16 %v1819, %v1818
        %v1833 = vpack.c.b16 %v1821, %v1820
        %v1834 = vpack.c.b16 %v1823, %v1822
        %v1835 = vpack.c.b16 %v1825, %v1824
        %v1836 = vpack.c.b16 %v1827, %v1826
        %v1837 = vpack.c.b16 %v1829, %v1828
        %1846 = vmatprep.subr.bf16.mxu0 0
        %1847 = vmatpush1.bf16.msra.mxu0 %v1830
        %1848 = vmatprep.subr.bf16.mxu0 0
        %1849 = vmatpush1.bf16.msra.mxu0 %v1831
        %1850 = vmatprep.subr.bf16.mxu0 0
        %1851 = vmatpush1.bf16.msra.mxu0 %v1832
        %1852 = vmatprep.subr.bf16.mxu0 0
        %1853 = vmatpush1.bf16.msra.mxu0 %v1833
        %1854 = vmatprep.subr.bf16.mxu0 0
        %1855 = vmatpush1.bf16.msra.mxu0 %v1834
        %1856 = vmatprep.subr.bf16.mxu0 0
        %1857 = vmatpush1.bf16.msra.mxu0 %v1835
        %1858 = vmatprep.subr.bf16.mxu0 0
        %1859 = vmatpush1.bf16.msra.mxu0 %v1836
        %1860 = vmatprep.subr.bf16.mxu0 0
        %1861 = vmatpush1.bf16.msra.mxu0 %v1837
        %1862 = vmatprep.subr.bf16.mxu0 0
        %1863 = vmatpush1.bf16.msra.mxu0 0
        %1864 = vmatprep.subr.bf16.mxu0 0
        %1865 = vmatpush1.bf16.msra.mxu0 0
        %1866 = vmatprep.subr.bf16.mxu0 0
        %1867 = vmatpush1.bf16.msra.mxu0 0
        %1868 = vmatprep.subr.bf16.mxu0 0
        %1869 = vmatpush1.bf16.msra.mxu0 0
        %1870 = vmatprep.subr.bf16.mxu0 0
        %1871 = vmatpush1.bf16.msra.mxu0 0
        %1872 = vmatprep.subr.bf16.mxu0 0
        %1873 = vmatpush1.bf16.msra.mxu0 0
        %1874 = vmatprep.subr.bf16.mxu0 0
        %1875 = vmatpush1.bf16.msra.mxu0 0
        %1876 = vmatprep.subr.bf16.mxu0 0
        %1877 = vmatpush1.bf16.msra.mxu0 0
        %1878 = vmatprep.mubr.bf16.mxu0 0
        %1879 = vmatmul.mubr.bf16.gmra.mrb[0].mxu0 %v1759
        %v1880 = vpop.f32.mrb[0].mxu0
        %v1881 = vadd.f32 %v1796, %v1880
        %v1882 = vpop.f32.mrb[0].mxu0
        %v1883 = vpop.f32.mrb[0].mxu0
        %v1884 = vadd.f32 %v1796, %v1883
        %v1885 = vpop.f32.mrb[0].mxu0
        %1886 = vmatprep.mubr.bf16.mxu0 0
        %1887 = vmatmul.mubr.bf16.gmra.mrb[0].mxu0 %v1760
        %v1888 = vpop.f32.mrb[0].mxu0
        %v1889 = vadd.f32 %v1796, %v1888
        %v1890 = vpop.f32.mrb[0].mxu0
        %v1891 = vpop.f32.mrb[0].mxu0
        %v1892 = vadd.f32 %v1796, %v1891
        %v1893 = vpop.f32.mrb[0].mxu0
        %1894 = vmatprep.mubr.bf16.mxu0 0
        %1895 = vmatmul.mubr.bf16.gmra.mrb[0].mxu0 %v1761
        %v1896 = vpop.f32.mrb[0].mxu0
        %v1897 = vadd.f32 %v1796, %v1896
        %v1898 = vpop.f32.mrb[0].mxu0
        %v1899 = vpop.f32.mrb[0].mxu0
        %v1900 = vadd.f32 %v1796, %v1899
        %v1901 = vpop.f32.mrb[0].mxu0
        %1902 = vmatprep.mubr.bf16.mxu0 0
        %1903 = vmatmul.mubr.bf16.gmra.mrb[0].mxu0 %v1762
        %v1904 = vpop.f32.mrb[0].mxu0
        %v1905 = vadd.f32 %v1796, %v1904
        %v1906 = vpop.f32.mrb[0].mxu0
        %v1907 = vpop.f32.mrb[0].mxu0
        %v1908 = vadd.f32 %v1796, %v1907
        %v1909 = vpop.f32.mrb[0].mxu0
        %1910 = vmatprep.mubr.bf16.mxu0 0
        %1911 = vmatmul.mubr.bf16.gmra.mrb[0].mxu0 %v1763
        %v1912 = vpop.f32.mrb[0].mxu0
        %v1913 = vadd.f32 %v1796, %v1912
        %v1914 = vpop.f32.mrb[0].mxu0
        %v1915 = vpop.f32.mrb[0].mxu0
        %v1916 = vadd.f32 %v1796, %v1915
        %v1917 = vpop.f32.mrb[0].mxu0
        %1918 = vmatprep.mubr.bf16.mxu0 0
        %1919 = vmatmul.mubr.bf16.gmra.mrb[0].mxu0 %v1764
        %v1920 = vpop.f32.mrb[0].mxu0
        %v1921 = vadd.f32 %v1796, %v1920
        %v1922 = vpop.f32.mrb[0].mxu0
        %v1923 = vpop.f32.mrb[0].mxu0
        %v1924 = vadd.f32 %v1796, %v1923
        %v1925 = vpop.f32.mrb[0].mxu0
        %1926 = vmatprep.mubr.bf16.mxu0 0
        %1927 = vmatmul.mubr.bf16.gmra.mrb[0].mxu0 %v1765
        %v1928 = vpop.f32.mrb[0].mxu0
        %v1929 = vadd.f32 %v1796, %v1928
        %v1930 = vpop.f32.mrb[0].mxu0
        %v1931 = vpop.f32.mrb[0].mxu0
        %v1932 = vadd.f32 %v1796, %v1931
        %v1933 = vpop.f32.mrb[0].mxu0
        %1934 = vmatprep.mubr.bf16.mxu0 0
        %1935 = vmatmul.mubr.bf16.gmra.mrb[0].mxu0 %v1766
        %v1936 = vpop.f32.mrb[0].mxu0
        %v1937 = vadd.f32 %v1796, %v1936
        %v1938 = vpop.f32.mrb[0].mxu0
        %v1939 = vpop.f32.mrb[0].mxu0
        %v1940 = vadd.f32 %v1796, %v1939
        %v1941 = vpop.f32.mrb[0].mxu0
        %1942 = vmatprep.mubr.bf16.mxu0 0
        %1943 = vmatmul.mubr.bf16.gmra.mrb[0].mxu0 %v1767
        %v1944 = vpop.f32.mrb[0].mxu0
        %v1945 = vadd.f32 %v1796, %v1944
        %v1946 = vpop.f32.mrb[0].mxu0
        %v1947 = vpop.f32.mrb[0].mxu0
        %v1948 = vadd.f32 %v1796, %v1947
        %v1949 = vpop.f32.mrb[0].mxu0
        %1950 = vmatprep.mubr.bf16.mxu0 0
        %1951 = vmatmul.mubr.bf16.gmra.mrb[0].mxu0 %v1768
        %v1952 = vpop.f32.mrb[0].mxu0
        %v1953 = vadd.f32 %v1796, %v1952
        %v1954 = vpop.f32.mrb[0].mxu0
        %v1955 = vpop.f32.mrb[0].mxu0
        %v1956 = vadd.f32 %v1796, %v1955
        %v1957 = vpop.f32.mrb[0].mxu0
        %1958 = vmatprep.mubr.bf16.mxu0 0
        %1959 = vmatmul.mubr.bf16.gmra.mrb[0].mxu0 %v1769
        %v1960 = vpop.f32.mrb[0].mxu0
        %v1961 = vadd.f32 %v1796, %v1960
        %v1962 = vpop.f32.mrb[0].mxu0
        %v1963 = vpop.f32.mrb[0].mxu0
        %v1964 = vadd.f32 %v1796, %v1963
        %v1965 = vpop.f32.mrb[0].mxu0
        %1966 = vmatprep.mubr.bf16.mxu0 0
        %1967 = vmatmul.mubr.bf16.gmra.mrb[0].mxu0 %v1770
        %v1968 = vpop.f32.mrb[0].mxu0
        %v1969 = vadd.f32 %v1796, %v1968
        %v1970 = vpop.f32.mrb[0].mxu0
        %v1971 = vpop.f32.mrb[0].mxu0
        %v1972 = vadd.f32 %v1796, %v1971
        %v1973 = vpop.f32.mrb[0].mxu0
        %1974 = vmatprep.mubr.bf16.mxu0 0
        %1975 = vmatmul.mubr.bf16.gmra.mrb[0].mxu0 %v1771
        %v1976 = vpop.f32.mrb[0].mxu0
        %v1977 = vadd.f32 %v1796, %v1976
        %v1978 = vpop.f32.mrb[0].mxu0
        %v1979 = vpop.f32.mrb[0].mxu0
        %v1980 = vadd.f32 %v1796, %v1979
        %v1981 = vpop.f32.mrb[0].mxu0
        %1982 = vmatprep.mubr.bf16.mxu0 0
        %1983 = vmatmul.mubr.bf16.gmra.mrb[0].mxu0 %v1772
        %v1984 = vpop.f32.mrb[0].mxu0
        %v1985 = vadd.f32 %v1796, %v1984
        %v1986 = vpop.f32.mrb[0].mxu0
        %v1987 = vpop.f32.mrb[0].mxu0
        %v1988 = vadd.f32 %v1796, %v1987
        %v1989 = vpop.f32.mrb[0].mxu0
        %1990 = vmatprep.mubr.bf16.mxu0 0
        %1991 = vmatmul.mubr.bf16.gmra.mrb[0].mxu0 %v1773
        %v1992 = vpop.f32.mrb[0].mxu0
        %v1993 = vadd.f32 %v1796, %v1992
        %v1994 = vpop.f32.mrb[0].mxu0
        %v1995 = vpop.f32.mrb[0].mxu0
        %v1996 = vadd.f32 %v1796, %v1995
        %v1997 = vpop.f32.mrb[0].mxu0
        %1998 = vmatprep.mubr.bf16.mxu0 0
        %1999 = vmatmul.mubr.bf16.gmra.mrb[0].mxu0 %v1774
        %v2000 = vpop.f32.mrb[0].mxu0
        %v2001 = vadd.f32 %v1796, %v2000
        %v2002 = vpop.f32.mrb[0].mxu0
        %v2003 = vpop.f32.mrb[0].mxu0
        %v2004 = vadd.f32 %v1796, %v2003
        %v2005 = vpop.f32.mrb[0].mxu0
        %2006 = vdwg.mxu0
        %2007 = vst [vmem:[%s348] sm:$0xff] %v1881
        %2008 = vst [vmem:[%s348 + $0x8] sm:$0xff] %v1884
        %2009 = vst [vmem:[%s348 + $0x10] sm:$0xff] %v1889
        %2010 = vst [vmem:[%s348 + $0x18] sm:$0xff] %v1892
        %2011 = vst [vmem:[%s348 + $0x20] sm:$0xff] %v1897
        %2012 = vst [vmem:[%s348 + $0x28] sm:$0xff] %v1900
        %2013 = vst [vmem:[%s348 + $0x30] sm:$0xff] %v1905
        %2014 = vst [vmem:[%s348 + $0x38] sm:$0xff] %v1908
        %2015 = vst [vmem:[%s348 + $0x40] sm:$0xff] %v1913
        %2016 = vst [vmem:[%s348 + $0x48] sm:$0xff] %v1916
        %2017 = vst [vmem:[%s348 + $0x50] sm:$0xff] %v1921
        %2018 = vst [vmem:[%s348 + $0x58] sm:$0xff] %v1924
        %2019 = vst [vmem:[%s348 + $0x60] sm:$0xff] %v1929
        %2020 = vst [vmem:[%s348 + $0x68] sm:$0xff] %v1932
        %2021 = vst [vmem:[%s348 + $0x70] sm:$0xff] %v1937
        %2022 = vst [vmem:[%s348 + $0x78] sm:$0xff] %v1940
        %2023 = vst [vmem:[%s348 + $0x80] sm:$0xff] %v1945
        %2024 = vst [vmem:[%s348 + $0x88] sm:$0xff] %v1948
        %2025 = vst [vmem:[%s348 + $0x90] sm:$0xff] %v1953
        %2026 = vst [vmem:[%s348 + $0x98] sm:$0xff] %v1956
        %2027 = vst [vmem:[%s348 + $0xa0] sm:$0xff] %v1961
        %2028 = vst [vmem:[%s348 + $0xa8] sm:$0xff] %v1964
        %2029 = vst [vmem:[%s348 + $0xb0] sm:$0xff] %v1969
        %2030 = vst [vmem:[%s348 + $0xb8] sm:$0xff] %v1972
        %2031 = vst [vmem:[%s348 + $0xc0] sm:$0xff] %v1977
        %2032 = vst [vmem:[%s348 + $0xc8] sm:$0xff] %v1980
        %2033 = vst [vmem:[%s348 + $0xd0] sm:$0xff] %v1985
        %2034 = vst [vmem:[%s348 + $0xd8] sm:$0xff] %v1988
        %2035 = vst [vmem:[%s348 + $0xe0] sm:$0xff] %v1993
        %2036 = vst [vmem:[%s348 + $0xe8] sm:$0xff] %v1996
        %2037 = vst [vmem:[%s348 + $0xf0] sm:$0xff] %v2001
        %2038 = vst [vmem:[%s348 + $0xf8] sm:$0xff] %v2004
        %s2039 = sand.u32 %s186, 1
        %s2040 = scalar_lea.sflag [#allocation4], %s2039
        %s2041 = sand.u32 %s186, 1
        %s2042 = smul.addr %s2041, 256
        %s2043 = scalar_lea.vmem [#allocation10], %s2042
        // Predicated region
        $region65: #{tpu_custom_call.1} parent=47 // pred_check
          %p2044 = pneg %p196
        $region66: #{tpu_custom_call.1} parent=47 // pred_check_branch
          %2046 = sbr.rel (%p2044) target = $region68
        $region67: #{tpu_custom_call.1} parent=47 // pred_region
          %s2047 = smul.u32 32, %s26
          %s2048 = ssub.s32 38, %s2047
          %p2049 = scmp.lt.s32.totalorder %s2048, 32
          %s2050 = scalar_select %p2049, %s2048, 32
          %s2051 = smul.u32 128, %s2050
          %s2053 = ssub.s32 4096, %s2051
          %2054 = vsyncadd %s2040, %s2053
          %p2055 = scmp.ne.s32.totalorder 0, %s2051
          %s2056 = smul.addr %s2047, 128
          %s2057 = scalar_lea.hbm %s7, %s2056
          %s2058 = smul.u32 8, %s2050
          %s2059 = sshll.u32 %s2043, 4
          %s2060 = int_to_ptr.vmem [resolvable:$true] %s2059
          %s2061 = sshll.u32 %s2058, 4
          %2065 = dma.vmem_to_hbm [thread:$0]  (%p2055), %s2060, %s2061, %s2057, %s2040, 128, 128, 8
        $region68: #{tpu_custom_call.1} parent=47 // pred_fallthru
          _
      $region48: #{tpu_custom_call.1} parent=5 // pred_fallthru
        _
      %p2066 = scmp.le.s32.totalorder 2, %s21
      // Predicated region
      $region69: #{tpu_custom_call.1} parent=5 // pred_check
        %p2067 = pneg %p2066
      $region70: #{tpu_custom_call.1} parent=5 // pred_check_branch
        %2069 = sbr.rel (%p2067) target = $region72
      $region71: #{tpu_custom_call.1} parent=5 // pred_region
        %s2070 = ssub.s32 %s21, 2
        // Predicated region
        $region73: #{tpu_custom_call.1} parent=71 // pred_check
          %p2071 = pneg %p202
        $region74: #{tpu_custom_call.1} parent=71 // pred_check_branch
          %2073 = sbr.rel (%p2071) target = $region76
        $region75: #{tpu_custom_call.1} parent=71 // pred_region
          %s2074 = sand.u32 %s187, 1
          %s2075 = scalar_lea.sflag [#allocation4], %s2074
          %s2076 = sand.u32 %s187, 1
          %s2077 = smul.addr %s2076, 256
          %s2078 = scalar_lea.vmem [#allocation10], %s2077
          %2079 = dma.done %s2075, 4096
        $region76: #{tpu_custom_call.1} parent=71 // pred_fallthru
          _
      $region72: #{tpu_custom_call.1} parent=5 // pred_fallthru
        _
    $region6: #{tpu_custom_call.1} parent=1 // loop_footer
      %s25 = sadd.s32 1, %s21
    $region7: #{tpu_custom_call.1} parent=1 // loop_footer_branch
      %20 = sbr.rel target = $region3
    $region8: #{tpu_custom_call.1} parent=1 // loop_exit
      _
    %2080 = vsyncpa [#allocation3], 1
    %s2081 = scalar_lea.sflag [#allocation3], 1
    %2082 = vsyncpa %s2081, 1
    %2083 = vsyncpa [#allocation6], 1
    %2084 = vsyncpa [#allocation9], 1
    %2085 = vsyncpa [#allocation4], 1
    %s2086 = scalar_lea.sflag [#allocation4], 1
    %2087 = vsyncpa %s2086, 1

</llo_original>
